<compile_context>
chip_gen: v6e
topology: v6e:2x2x1
jax: 0.10.0
libtpu: 0.0.40
codegen_flags: <defaults>
</compile_context>

<pallas_src>
import functools

import jax
import jax.numpy as jnp
from jax.experimental import pallas as pl
from jax.experimental.pallas import tpu as pltpu


# ----------------------------- config ---------------------------------------
NUM_CLASSES = 10
IMG_SHAPE = (1, 16, 16)          # (C, H, W)
CONDITIONED = True
N_LAYERS = 2                     # number of LinearDropout blocks
HIDDEN = 512
BATCH = 2
LEAK = 0.2


def _round_up(x, m):
    return ((x + m - 1) // m) * m


def _leaky_relu(x, neg_slope=LEAK):
    # one vmul + one vmax (neg_slope in (0,1) so this equals leaky relu)
    return jnp.maximum(x, neg_slope * x)


# ----------------------------- kernel ---------------------------------------
def _disc_kernel(n_layers,
                 x_ref, w0_ref, b0_ref, wh_ref, bh_ref, wf_ref, bf_ref,
                 o_ref):
    # x_ref : (TILE_B, in_pad)        f32
    # w0_ref: (in_pad, HIDDEN)        bf16    b0_ref: (1, HIDDEN)      bf16
    # wh_ref: (L, HIDDEN, HIDDEN)     bf16    bh_ref: (L, 1, HIDDEN)   bf16
    # wf_ref: (1, HIDDEN)             bf16    bf_ref: (1, 1)           bf16
    # o_ref : (TILE_B, 1)             f32
    x = x_ref[...].astype(jnp.bfloat16)
    h = jnp.dot(x, w0_ref[...], preferred_element_type=jnp.float32)
    h = _leaky_relu(h + b0_ref[...].astype(jnp.float32))

    # Static unroll over the hidden blocks (n_layers is a Python int).
    for i in range(n_layers):
        h = jnp.dot(h.astype(jnp.bfloat16), wh_ref[i],
                    preferred_element_type=jnp.float32)
        # Dropout(0.4) -> identity in eval mode.
        h = _leaky_relu(h + bh_ref[i].astype(jnp.float32))

    # Final Linear(512, 1) as a lane-dense broadcast-multiply + lane reduce
    # (VPU + XLU) instead of an N=1 MXU matmul.
    wf = wf_ref[...].astype(jnp.float32)                 # (1, HIDDEN)
    logits = jnp.sum(h * wf, axis=-1, keepdims=True)     # (TILE_B, 1)
    o_ref[...] = logits + bf_ref[...].astype(jnp.float32)


# ----------------------------- wrappers --------------------------------------
def discriminator_forward(d_in, params, n_layers=N_LAYERS):
    """d_in: (B, in_pad) float32 (already padded). params already bf16/padded.

    Returns validity logits (B, 1) float32.
    """
    w0, b0, wh, bh, wf, bf = params
    B, in_pad = d_in.shape

    # Batch tiling: small batches use one 8-row tile; large batches tile at
    # 128 rows and shard the grid across TensorCores ("parallel").
    tile_b = min(128, _round_up(max(B, 1), 8))
    b_pad = _round_up(B, tile_b)
    if b_pad != B:
        d_in = jnp.pad(d_in, ((0, b_pad - B), (0, 0)))
    grid = (b_pad // tile_b,)

    kernel = functools.partial(_disc_kernel, n_layers)

    out = pl.pallas_call(
        kernel,
        out_shape=jax.ShapeDtypeStruct((b_pad, 1), jnp.float32),
        grid=grid,
        in_specs=[
            # activations: one batch tile per grid step
            pl.BlockSpec((tile_b, in_pad), lambda b: (b, 0)),
            # weights/biases: constant index_map -> VMEM-resident across tiles
            pl.BlockSpec(w0.shape, lambda b: (0, 0)),
            pl.BlockSpec(b0.shape, lambda b: (0, 0)),
            pl.BlockSpec(wh.shape, lambda b: (0, 0, 0)),
            pl.BlockSpec(bh.shape, lambda b: (0, 0, 0)),
            pl.BlockSpec(wf.shape, lambda b: (0, 0)),
            pl.BlockSpec(bf.shape, lambda b: (0, 0)),
        ],
        out_specs=pl.BlockSpec((tile_b, 1), lambda b: (b, 0)),
        compiler_params=pltpu.CompilerParams(
            dimension_semantics=("parallel",)),
    )(d_in, w0, b0, wh, bh, wf, bf)
    return out[:B]


@functools.partial(jax.jit, static_argnames=("n_layers", "conditioned"))
def discriminator_apply(img, labels, emb_table, params,
                        n_layers=N_LAYERS, conditioned=CONDITIONED):
    """Fused glue + kernel: flatten, embed, concat, pad, pallas_call."""
    B = img.shape[0]
    img_flat = img.reshape(B, -1)
    if conditioned:
        d_in = jnp.concatenate(
            [img_flat, jnp.take(emb_table, labels, axis=0)], axis=-1)
    else:
        d_in = img_flat
    in_pad = params[0].shape[0]          # w0 already row-padded
    extra = in_pad - d_in.shape[1]
    if extra:
        d_in = jnp.pad(d_in, ((0, 0), (0, extra)))
    return discriminator_forward(d_in, params, n_layers=n_layers)


# ----------------------------- params ----------------------------------------
def init_params(key, in_dim, n_layers=N_LAYERS, hidden=HIDDEN):
    """Deterministic init mimicking PyTorch nn.Linear default (U[-1/sqrt(fan_in), ...])."""
    keys = jax.random.split(key, 4 + 2 * max(n_layers, 1))

    def lin(kw, kb, fan_in, fan_out, w_shape=None):
        bound = 1.0 / jnp.sqrt(fan_in)
        shape = (fan_in, fan_out) if w_shape is None else w_shape
        w = jax.random.uniform(kw, shape, jnp.float32, -bound, bound)
        b = jax.random.uniform(kb, (1, fan_out), jnp.float32, -bound, bound)
        return w, b

    w0, b0 = lin(keys[0], keys[1], in_dim, hidden)

    if n_layers > 0:
        wh_list, bh_list = [], []
        for i in range(n_layers):
            w, b = lin(keys[2 + 2 * i], keys[3 + 2 * i], hidden, hidden)
            wh_list.append(w)
            bh_list.append(b)
        wh = jnp.stack(wh_list, axis=0)
        bh = jnp.stack(bh_list, axis=0)
    else:  # dummy (never read inside the unroll), keeps block shapes non-zero
        wh = jnp.zeros((1, hidden, hidden), jnp.float32)
        bh = jnp.zeros((1, 1, hidden), jnp.float32)

    # Final layer stored as (1, hidden) so the kernel can do a VPU reduction.
    wf, bf = lin(keys[2 + 2 * n_layers], keys[3 + 2 * n_layers],
                 hidden, 1, w_shape=(1, hidden))
    bf = bf.reshape(1, 1)
    return (w0, b0, wh, bh, wf, bf)


def prepare_params(params, in_dim_pad):
    """Cast all params to bf16 and zero-pad w0's fan-in to in_dim_pad."""
    w0, b0, wh, bh, wf, bf = params
    w0 = jnp.pad(w0, ((0, in_dim_pad - w0.shape[0]), (0, 0)))
    cast = lambda a: a.astype(jnp.bfloat16)
    return (cast(w0), cast(b0), cast(wh), cast(bh), cast(wf), cast(bf))


def reference_forward(d_in, params, n_layers=N_LAYERS):
    """Pure-JAX reference mirroring the kernel's mixed precision
    (bf16 weights + activations into the matmuls, f32 accumulation)."""
    w0, b0, wh, bh, wf, bf = [p.astype(jnp.bfloat16) for p in params]
    h = jnp.dot(d_in.astype(jnp.bfloat16), w0,
                preferred_element_type=jnp.float32)
    h = _leaky_relu(h + b0.astype(jnp.float32))
    for i in range(n_layers):
        h = jnp.dot(h.astype(jnp.bfloat16), wh[i],
                    preferred_element_type=jnp.float32)
        h = _leaky_relu(h + bh[i].astype(jnp.float32))
    return (jnp.sum(h * wf.astype(jnp.float32), axis=-1, keepdims=True)
            + bf.astype(jnp.float32))


# ----------------------------- main ------------------------------------------
if __name__ == "__main__":
    key = jax.random.PRNGKey(0)
    k_img, k_lab, k_emb, k_par = jax.random.split(key, 4)

    img_flat_dim = int(IMG_SHAPE[0] * IMG_SHAPE[1] * IMG_SHAPE[2])
    in_dim = NUM_CLASSES + img_flat_dim if CONDITIONED else img_flat_dim
    in_dim_pad = _round_up(in_dim, 128)

    # Example inputs (NCHW image + integer class labels), deterministic.
    img = jax.random.normal(k_img, (BATCH,) + IMG_SHAPE, dtype=jnp.float32)
    labels = jax.random.randint(k_lab, (BATCH,), 0, NUM_CLASSES)

    # nn.Embedding(num_classes, num_classes) -> lookup table, N(0,1) init.
    emb_table = jax.random.normal(k_emb, (NUM_CLASSES, NUM_CLASSES),
                                  dtype=jnp.float32)

    params_f32 = init_params(k_par, in_dim)
    params = prepare_params(params_f32, in_dim_pad)   # bf16, padded fan-in

    out = discriminator_apply(img, labels, emb_table, params)
    out = jax.block_until_ready(out)

    # Reference (unpadded inputs, same bf16-rounded weights).
    img_flat = img.reshape(BATCH, -1)
    d_in = (jnp.concatenate([img_flat, emb_table[labels]], axis=-1)
            if CONDITIONED else img_flat)
    ref = reference_forward(d_in, params_f32)

    assert out.shape == (BATCH, 1)
    assert jnp.allclose(out, ref, atol=1e-3, rtol=1e-3), (out, ref)

    print("KERNEL_OK")
</pallas_src>

<mosaic_0001>
module attributes {stable_mosaic.version = 11 : i64} {
  func.func @_disc_kernel(%arg0: i32, %arg1: memref<8x384xf32, #tpu.memory_space<vmem>>, %arg2: memref<384x512xbf16, #tpu.memory_space<vmem>>, %arg3: memref<1x512xbf16, #tpu.memory_space<vmem>>, %arg4: memref<2x512x512xbf16, #tpu.memory_space<vmem>>, %arg5: memref<2x1x512xbf16, #tpu.memory_space<vmem>>, %arg6: memref<1x512xbf16, #tpu.memory_space<vmem>>, %arg7: memref<1x1xbf16, #tpu.memory_space<vmem>>, %arg8: memref<8x1xf32, #tpu.memory_space<vmem>>) attributes {dimension_semantics = [#tpu.dimension_semantics<parallel>], iteration_bounds = array<i64: 1>, scalar_prefetch = 0 : i64, scratch_operands = 0 : i64, tpu.core_type = #tpu.core_type<tc>, window_params = [{transform_indices = @transform_0, window_bounds = array<i64: 8, 384>}, {pipeline_mode = #tpu.pipeline_mode<synchronous>, transform_indices = @transform_1, window_bounds = array<i64: 384, 512>}, {pipeline_mode = #tpu.pipeline_mode<synchronous>, transform_indices = @transform_2, window_bounds = array<i64: 1, 512>}, {pipeline_mode = #tpu.pipeline_mode<synchronous>, transform_indices = @transform_3, window_bounds = array<i64: 2, 512, 512>}, {pipeline_mode = #tpu.pipeline_mode<synchronous>, transform_indices = @transform_4, window_bounds = array<i64: 2, 1, 512>}, {pipeline_mode = #tpu.pipeline_mode<synchronous>, transform_indices = @transform_5, window_bounds = array<i64: 1, 512>}, {pipeline_mode = #tpu.pipeline_mode<synchronous>, transform_indices = @transform_6, window_bounds = array<i64: 1, 1>}, {transform_indices = @transform_7, window_bounds = array<i64: 8, 1>}]} {
    %c0 = arith.constant 0 : index
    %c0_0 = arith.constant 0 : index
    %0 = vector.load %arg1[%c0, %c0_0] : memref<8x384xf32, #tpu.memory_space<vmem>>, vector<8x384xf32>
    %1 = arith.truncf %0 : vector<8x384xf32> to vector<8x384xbf16>
    %c0_1 = arith.constant 0 : index
    %c0_2 = arith.constant 0 : index
    %2 = vector.load %arg2[%c0_1, %c0_2] : memref<384x512xbf16, #tpu.memory_space<vmem>>, vector<384x512xbf16>
    %cst = arith.constant dense<0.000000e+00> : vector<8x512xf32>
    %3 = tpu.matmul %1, %2, %cst {dimension_numbers = #tpu.dot_dimension_numbers<[1], [0], [0], [1], [0, 0, 1, 1], [], []>} : vector<8x384xbf16>, vector<384x512xbf16>, vector<8x512xf32> -> vector<8x512xf32>
    %c0_3 = arith.constant 0 : index
    %c0_4 = arith.constant 0 : index
    %4 = vector.load %arg3[%c0_3, %c0_4] : memref<1x512xbf16, #tpu.memory_space<vmem>>, vector<1x512xbf16>
    %5 = arith.extf %4 : vector<1x512xbf16> to vector<1x512xf32>
    %6 = vector.broadcast %5 : vector<1x512xf32> to vector<8x512xf32>
    %7 = arith.addf %3, %6 : vector<8x512xf32>
    %cst_5 = arith.constant 2.000000e-01 : f32
    %8 = vector.broadcast %cst_5 : f32 to vector<8x512xf32>
    %9 = arith.mulf %8, %7 : vector<8x512xf32>
    %10 = arith.maximumf %7, %9 : vector<8x512xf32>
    %11 = arith.truncf %10 : vector<8x512xf32> to vector<8x512xbf16>
    %c0_6 = arith.constant 0 : index
    %c0_7 = arith.constant 0 : index
    %c0_8 = arith.constant 0 : index
    %12 = vector.load %arg4[%c0_6, %c0_7, %c0_8] : memref<2x512x512xbf16, #tpu.memory_space<vmem>>, vector<1x512x512xbf16>
    %13 = vector.shape_cast %12 : vector<1x512x512xbf16> to vector<512x512xbf16>
    %cst_9 = arith.constant dense<0.000000e+00> : vector<8x512xf32>
    %14 = tpu.matmul %11, %13, %cst_9 {dimension_numbers = #tpu.dot_dimension_numbers<[1], [0], [0], [1], [0, 0, 1, 1], [], []>} : vector<8x512xbf16>, vector<512x512xbf16>, vector<8x512xf32> -> vector<8x512xf32>
    %c0_10 = arith.constant 0 : index
    %c0_11 = arith.constant 0 : index
    %c0_12 = arith.constant 0 : index
    %15 = vector.load %arg5[%c0_10, %c0_11, %c0_12] : memref<2x1x512xbf16, #tpu.memory_space<vmem>>, vector<1x1x512xbf16>
    %16 = vector.shape_cast %15 : vector<1x1x512xbf16> to vector<1x512xbf16>
    %17 = arith.extf %16 : vector<1x512xbf16> to vector<1x512xf32>
    %18 = vector.broadcast %17 : vector<1x512xf32> to vector<8x512xf32>
    %19 = arith.addf %14, %18 : vector<8x512xf32>
    %cst_13 = arith.constant 2.000000e-01 : f32
    %20 = vector.broadcast %cst_13 : f32 to vector<8x512xf32>
    %21 = arith.mulf %20, %19 : vector<8x512xf32>
    %22 = arith.maximumf %19, %21 : vector<8x512xf32>
    %23 = arith.truncf %22 : vector<8x512xf32> to vector<8x512xbf16>
    %c1 = arith.constant 1 : index
    %c0_14 = arith.constant 0 : index
    %c0_15 = arith.constant 0 : index
    %24 = vector.load %arg4[%c1, %c0_14, %c0_15] : memref<2x512x512xbf16, #tpu.memory_space<vmem>>, vector<1x512x512xbf16>
    %25 = vector.shape_cast %24 : vector<1x512x512xbf16> to vector<512x512xbf16>
    %cst_16 = arith.constant dense<0.000000e+00> : vector<8x512xf32>
    %26 = tpu.matmul %23, %25, %cst_16 {dimension_numbers = #tpu.dot_dimension_numbers<[1], [0], [0], [1], [0, 0, 1, 1], [], []>} : vector<8x512xbf16>, vector<512x512xbf16>, vector<8x512xf32> -> vector<8x512xf32>
    %c1_17 = arith.constant 1 : index
    %c0_18 = arith.constant 0 : index
    %c0_19 = arith.constant 0 : index
    %27 = vector.load %arg5[%c1_17, %c0_18, %c0_19] : memref<2x1x512xbf16, #tpu.memory_space<vmem>>, vector<1x1x512xbf16>
    %28 = vector.shape_cast %27 : vector<1x1x512xbf16> to vector<1x512xbf16>
    %29 = arith.extf %28 : vector<1x512xbf16> to vector<1x512xf32>
    %30 = vector.broadcast %29 : vector<1x512xf32> to vector<8x512xf32>
    %31 = arith.addf %26, %30 : vector<8x512xf32>
    %cst_20 = arith.constant 2.000000e-01 : f32
    %32 = vector.broadcast %cst_20 : f32 to vector<8x512xf32>
    %33 = arith.mulf %32, %31 : vector<8x512xf32>
    %34 = arith.maximumf %31, %33 : vector<8x512xf32>
    %c0_21 = arith.constant 0 : index
    %c0_22 = arith.constant 0 : index
    %35 = vector.load %arg6[%c0_21, %c0_22] : memref<1x512xbf16, #tpu.memory_space<vmem>>, vector<1x512xbf16>
    %36 = arith.extf %35 : vector<1x512xbf16> to vector<1x512xf32>
    %37 = vector.broadcast %36 : vector<1x512xf32> to vector<8x512xf32>
    %38 = arith.mulf %34, %37 : vector<8x512xf32>
    %cst_23 = arith.constant dense<0.000000e+00> : vector<8xf32>
    %39 = vector.multi_reduction <add>, %38, %cst_23 [1] : vector<8x512xf32> to vector<8xf32>
    %40 = vector.shape_cast %39 : vector<8xf32> to vector<8x1xf32>
    %c0_24 = arith.constant 0 : index
    %c0_25 = arith.constant 0 : index
    %41 = vector.load %arg7[%c0_24, %c0_25] : memref<1x1xbf16, #tpu.memory_space<vmem>>, vector<1x1xbf16>
    %42 = arith.extf %41 : vector<1x1xbf16> to vector<1x1xf32>
    %43 = vector.broadcast %42 : vector<1x1xf32> to vector<8x1xf32>
    %44 = arith.addf %40, %43 : vector<8x1xf32>
    %c0_26 = arith.constant 0 : index
    %c0_27 = arith.constant 0 : index
    %45 = vector.load %arg8[%c0_26, %c0_27] : memref<8x1xf32, #tpu.memory_space<vmem>>, vector<8x1xf32>
    tpu.vector_store %arg8[%c0_26, %c0_27], %44 {strides = array<i32>} : memref<8x1xf32, #tpu.memory_space<vmem>>, vector<8x1xf32>,
    return
  }
  func.func @transform_0(%arg0: i32) -> (i32, i32) {
    %c0_i32 = arith.constant 0 : i32
    %c0_i32_0 = arith.constant 0 : i32
    return %arg0, %c0_i32 : i32, i32
  }
  func.func @transform_1(%arg0: i32) -> (i32, i32) {
    %c0_i32 = arith.constant 0 : i32
    %c0_i32_0 = arith.constant 0 : i32
    %c0_i32_1 = arith.constant 0 : i32
    return %c0_i32, %c0_i32_0 : i32, i32
  }
  func.func @transform_2(%arg0: i32) -> (i32, i32) {
    %c0_i32 = arith.constant 0 : i32
    %c0_i32_0 = arith.constant 0 : i32
    %c0_i32_1 = arith.constant 0 : i32
    return %c0_i32, %c0_i32_0 : i32, i32
  }
  func.func @transform_3(%arg0: i32) -> (i32, i32, i32) {
    %c0_i32 = arith.constant 0 : i32
    %c0_i32_0 = arith.constant 0 : i32
    %c0_i32_1 = arith.constant 0 : i32
    %c0_i32_2 = arith.constant 0 : i32
    return %c0_i32, %c0_i32_0, %c0_i32_1 : i32, i32, i32
  }
  func.func @transform_4(%arg0: i32) -> (i32, i32, i32) {
    %c0_i32 = arith.constant 0 : i32
    %c0_i32_0 = arith.constant 0 : i32
    %c0_i32_1 = arith.constant 0 : i32
    %c0_i32_2 = arith.constant 0 : i32
    return %c0_i32, %c0_i32_0, %c0_i32_1 : i32, i32, i32
  }
  func.func @transform_5(%arg0: i32) -> (i32, i32) {
    %c0_i32 = arith.constant 0 : i32
    %c0_i32_0 = arith.constant 0 : i32
    %c0_i32_1 = arith.constant 0 : i32
    return %c0_i32, %c0_i32_0 : i32, i32
  }
  func.func @transform_6(%arg0: i32) -> (i32, i32) {
    %c0_i32 = arith.constant 0 : i32
    %c0_i32_0 = arith.constant 0 : i32
    %c0_i32_1 = arith.constant 0 : i32
    return %c0_i32, %c0_i32_0 : i32, i32
  }
  func.func @transform_7(%arg0: i32) -> (i32, i32) {
    %c0_i32 = arith.constant 0 : i32
    %c0_i32_0 = arith.constant 0 : i32
    return %arg0, %c0_i32 : i32, i32
  }
}

</mosaic_0001>

<llo_original>
// kernel: discriminator_apply.1
$region0: #{discriminator_apply.1}
  #allocation0 [shape = 'u32[]', space=smem, size = 0x4, offset = 0x4, fixed_abs, tag = 'smem constant byte address 0x4 - core index']
  #allocation1 [shape = 'u32[144,128]{1,0:T(1,128)}', space=vmem, size = 0x12000, scoped, tag = 'internal scratch']
  #allocation2 [shape = 'bf16[1,1]{1,0:T(2,128)S(1)}', space=vmem, size = 0x200, scoped, tag = 'scoped memory for discriminator_apply.1']
  %s0 = inlined_call_operand.vmem [shape: f32[8,384], index: 0, kind: input, shape index: {}]
  %s1 = inlined_call_operand.hbm [shape: bf16[384,512], index: 1, kind: input, shape index: {}]
  %s2 = inlined_call_operand.vmem [shape: bf16[1,512], index: 2, kind: input, shape index: {}]
  %s3 = inlined_call_operand.hbm [shape: bf16[2,512,512], index: 3, kind: input, shape index: {}]
  %s4 = inlined_call_operand.vmem [shape: bf16[2,1,512], index: 4, kind: input, shape index: {}]
  %s5 = inlined_call_operand.vmem [shape: bf16[1,512], index: 5, kind: input, shape index: {}]
  %s6 = inlined_call_operand.<no memory space> [shape: bf16[1,1], index: 6, kind: input, shape index: {}]
  %s7 = inlined_call_operand.vmem [shape: f32[8,1], index: 7, kind: output, shape index: {}]
  %s8 = sld [smem:[#allocation0]]
  $region46: #{discriminator_apply.1} parent=0
    _
  %s10 = ssub.s32 1, %s8
  %s11 = scalar_select 0, %s10, %s8
  %v12 = vstv %s6
  %13 = vst [vmem:[#allocation2] sm:$0x1] %v12
  $region1: #{discriminator_apply.1} parent=0
    #allocation3 [shape = 'u8[393216]{0}', space=vmem, size = 0x60000, scoped, tag = 'input window, operand 1, single buffered']
    #allocation4 [shape = 's32[1]{0}', space=sflag, size = 0x4, scoped, tag = 'scoped memory for discriminator_apply.1']
    #allocation5 [shape = 'u8[1048576]{0}', space=vmem, size = 0x100000, scoped, tag = 'input window, operand 3, single buffered']
    #allocation6 [shape = 's32[1]{0}', space=sflag, size = 0x4, scoped, tag = 'scoped memory for discriminator_apply.1']
    %14 = vsyncpa [#allocation4], 0
    %15 = vsyncpa [#allocation6], 0
    // Predicated region
    $region2: #{discriminator_apply.1} parent=1 // pred_check
      _
    $region3: #{discriminator_apply.1} parent=1 // pred_check_branch
      %17 = sbr.rel (0) target = $region5
    $region4: #{discriminator_apply.1} parent=1 // pred_region
      _
    $region5: #{discriminator_apply.1} parent=1 // pred_fallthru
      _
    // Predicated region
    $region6: #{discriminator_apply.1} parent=1 // pred_check
      _
    $region7: #{discriminator_apply.1} parent=1 // pred_check_branch
      %19 = sbr.rel (0) target = $region9
    $region8: #{discriminator_apply.1} parent=1 // pred_region
      %s21 = ssub.s32 12288, 12288
      %22 = vsyncadd [#allocation4], %s21
      %s23 = sshll.u32 [#allocation3], 4
      %s24 = int_to_ptr.vmem [resolvable:$true] %s23
      %29 = dma.hbm_to_vmem [thread:$0]  %s1, 12288, %s24, [#allocation4], 256, 256, 16
    $region9: #{discriminator_apply.1} parent=1 // pred_fallthru
      _
    // Predicated region
    $region10: #{discriminator_apply.1} parent=1 // pred_check
      _
    $region11: #{discriminator_apply.1} parent=1 // pred_check_branch
      %31 = sbr.rel (0) target = $region13
    $region12: #{discriminator_apply.1} parent=1 // pred_region
      _
    $region13: #{discriminator_apply.1} parent=1 // pred_fallthru
      _
    // Predicated region
    $region14: #{discriminator_apply.1} parent=1 // pred_check
      _
    $region15: #{discriminator_apply.1} parent=1 // pred_check_branch
      %33 = sbr.rel (0) target = $region17
    $region16: #{discriminator_apply.1} parent=1 // pred_region
      %s35 = ssub.s32 32768, 32768
      %36 = vsyncadd [#allocation6], %s35
      %s37 = sshll.u32 [#allocation5], 4
      %s38 = int_to_ptr.vmem [resolvable:$true] %s37
      %43 = dma.hbm_to_vmem [thread:$0]  %s3, 32768, %s38, [#allocation6], 256, 256, 16
    $region17: #{discriminator_apply.1} parent=1 // pred_fallthru
      _
    // Predicated region
    $region18: #{discriminator_apply.1} parent=1 // pred_check
      _
    $region19: #{discriminator_apply.1} parent=1 // pred_check_branch
      %45 = sbr.rel (0) target = $region21
    $region20: #{discriminator_apply.1} parent=1 // pred_region
      _
    $region21: #{discriminator_apply.1} parent=1 // pred_fallthru
      _
    // Predicated region
    $region22: #{discriminator_apply.1} parent=1 // pred_check
      _
    $region23: #{discriminator_apply.1} parent=1 // pred_check_branch
      %47 = sbr.rel (0) target = $region25
    $region24: #{discriminator_apply.1} parent=1 // pred_region
      _
    $region25: #{discriminator_apply.1} parent=1 // pred_fallthru
      _
    // Predicated region
    $region26: #{discriminator_apply.1} parent=1 // pred_check
      _
    $region27: #{discriminator_apply.1} parent=1 // pred_check_branch
      %49 = sbr.rel (0) target = $region29
    $region28: #{discriminator_apply.1} parent=1 // pred_region
      _
    $region29: #{discriminator_apply.1} parent=1 // pred_fallthru
      _
    // Predicated region
    $region30: #{discriminator_apply.1} parent=1 // pred_check
      _
    $region31: #{discriminator_apply.1} parent=1 // pred_check_branch
      %51 = sbr.rel (0) target = $region33
    $region32: #{discriminator_apply.1} parent=1 // pred_region
      %52 = dma.done [#allocation4], 12288
    $region33: #{discriminator_apply.1} parent=1 // pred_fallthru
      _
    // Predicated region
    $region34: #{discriminator_apply.1} parent=1 // pred_check
      _
    $region35: #{discriminator_apply.1} parent=1 // pred_check_branch
      %54 = sbr.rel (0) target = $region37
    $region36: #{discriminator_apply.1} parent=1 // pred_region
      %55 = dma.done [#allocation6], 32768
    $region37: #{discriminator_apply.1} parent=1 // pred_fallthru
      _
    %v57 = vld [vmem:[%s0] sm:$0xff]
    %v58 = vld [vmem:[%s0 + $0x8] sm:$0xff]
    %v59 = vld [vmem:[%s0 + $0x10] sm:$0xff]
    %v60 = vpack.c.bf16 %v57, %v57
    %v61 = vpack.c.bf16 %v58, %v58
    %v62 = vpack.c.bf16 %v59, %v59
    %v63 = vld [vmem:[#allocation3] sm:$0xff]
    %v64 = vld [vmem:[#allocation3 + $0x8] sm:$0xff]
    %v65 = vld [vmem:[#allocation3 + $0x10] sm:$0xff]
    %v66 = vld [vmem:[#allocation3 + $0x18] sm:$0xff]
    %v67 = vld [vmem:[#allocation3 + $0x20] sm:$0xff]
    %v68 = vld [vmem:[#allocation3 + $0x28] sm:$0xff]
    %v69 = vld [vmem:[#allocation3 + $0x30] sm:$0xff]
    %v70 = vld [vmem:[#allocation3 + $0x38] sm:$0xff]
    %v71 = vld [vmem:[#allocation3 + $0x40] sm:$0xff]
    %v72 = vld [vmem:[#allocation3 + $0x48] sm:$0xff]
    %v73 = vld [vmem:[#allocation3 + $0x50] sm:$0xff]
    %v74 = vld [vmem:[#allocation3 + $0x58] sm:$0xff]
    %v75 = vld [vmem:[#allocation3 + $0x60] sm:$0xff]
    %v76 = vld [vmem:[#allocation3 + $0x68] sm:$0xff]
    %v77 = vld [vmem:[#allocation3 + $0x70] sm:$0xff]
    %v78 = vld [vmem:[#allocation3 + $0x78] sm:$0xff]
    %v79 = vld [vmem:[#allocation3 + $0x80] sm:$0xff]
    %v80 = vld [vmem:[#allocation3 + $0x88] sm:$0xff]
    %v81 = vld [vmem:[#allocation3 + $0x90] sm:$0xff]
    %v82 = vld [vmem:[#allocation3 + $0x98] sm:$0xff]
    %v83 = vld [vmem:[#allocation3 + $0xa0] sm:$0xff]
    %v84 = vld [vmem:[#allocation3 + $0xa8] sm:$0xff]
    %v85 = vld [vmem:[#allocation3 + $0xb0] sm:$0xff]
    %v86 = vld [vmem:[#allocation3 + $0xb8] sm:$0xff]
    %v87 = vld [vmem:[#allocation3 + $0xc0] sm:$0xff]
    %v88 = vld [vmem:[#allocation3 + $0xc8] sm:$0xff]
    %v89 = vld [vmem:[#allocation3 + $0xd0] sm:$0xff]
    %v90 = vld [vmem:[#allocation3 + $0xd8] sm:$0xff]
    %v91 = vld [vmem:[#allocation3 + $0xe0] sm:$0xff]
    %v92 = vld [vmem:[#allocation3 + $0xe8] sm:$0xff]
    %v93 = vld [vmem:[#allocation3 + $0xf0] sm:$0xff]
    %v94 = vld [vmem:[#allocation3 + $0xf8] sm:$0xff]
    %v95 = vld [vmem:[#allocation3 + $0x100] sm:$0xff]
    %v96 = vld [vmem:[#allocation3 + $0x108] sm:$0xff]
    %v97 = vld [vmem:[#allocation3 + $0x110] sm:$0xff]
    %v98 = vld [vmem:[#allocation3 + $0x118] sm:$0xff]
    %v99 = vld [vmem:[#allocation3 + $0x120] sm:$0xff]
    %v100 = vld [vmem:[#allocation3 + $0x128] sm:$0xff]
    %v101 = vld [vmem:[#allocation3 + $0x130] sm:$0xff]
    %v102 = vld [vmem:[#allocation3 + $0x138] sm:$0xff]
    %v103 = vld [vmem:[#allocation3 + $0x140] sm:$0xff]
    %v104 = vld [vmem:[#allocation3 + $0x148] sm:$0xff]
    %v105 = vld [vmem:[#allocation3 + $0x150] sm:$0xff]
    %v106 = vld [vmem:[#allocation3 + $0x158] sm:$0xff]
    %v107 = vld [vmem:[#allocation3 + $0x160] sm:$0xff]
    %v108 = vld [vmem:[#allocation3 + $0x168] sm:$0xff]
    %v109 = vld [vmem:[#allocation3 + $0x170] sm:$0xff]
    %v110 = vld [vmem:[#allocation3 + $0x178] sm:$0xff]
    %v111 = vld [vmem:[#allocation3 + $0x180] sm:$0xff]
    %v112 = vld [vmem:[#allocation3 + $0x188] sm:$0xff]
    %v113 = vld [vmem:[#allocation3 + $0x190] sm:$0xff]
    %v114 = vld [vmem:[#allocation3 + $0x198] sm:$0xff]
    %v115 = vld [vmem:[#allocation3 + $0x1a0] sm:$0xff]
    %v116 = vld [vmem:[#allocation3 + $0x1a8] sm:$0xff]
    %v117 = vld [vmem:[#allocation3 + $0x1b0] sm:$0xff]
    %v118 = vld [vmem:[#allocation3 + $0x1b8] sm:$0xff]
    %v119 = vld [vmem:[#allocation3 + $0x1c0] sm:$0xff]
    %v120 = vld [vmem:[#allocation3 + $0x1c8] sm:$0xff]
    %v121 = vld [vmem:[#allocation3 + $0x1d0] sm:$0xff]
    %v122 = vld [vmem:[#allocation3 + $0x1d8] sm:$0xff]
    %v123 = vld [vmem:[#allocation3 + $0x1e0] sm:$0xff]
    %v124 = vld [vmem:[#allocation3 + $0x1e8] sm:$0xff]
    %v125 = vld [vmem:[#allocation3 + $0x1f0] sm:$0xff]
    %v126 = vld [vmem:[#allocation3 + $0x1f8] sm:$0xff]
    %v127 = vld [vmem:[#allocation3 + $0x200] sm:$0xff]
    %v128 = vld [vmem:[#allocation3 + $0x208] sm:$0xff]
    %v129 = vld [vmem:[#allocation3 + $0x210] sm:$0xff]
    %v130 = vld [vmem:[#allocation3 + $0x218] sm:$0xff]
    %v131 = vld [vmem:[#allocation3 + $0x220] sm:$0xff]
    %v132 = vld [vmem:[#allocation3 + $0x228] sm:$0xff]
    %v133 = vld [vmem:[#allocation3 + $0x230] sm:$0xff]
    %v134 = vld [vmem:[#allocation3 + $0x238] sm:$0xff]
    %v135 = vld [vmem:[#allocation3 + $0x240] sm:$0xff]
    %v136 = vld [vmem:[#allocation3 + $0x248] sm:$0xff]
    %v137 = vld [vmem:[#allocation3 + $0x250] sm:$0xff]
    %v138 = vld [vmem:[#allocation3 + $0x258] sm:$0xff]
    %v139 = vld [vmem:[#allocation3 + $0x260] sm:$0xff]
    %v140 = vld [vmem:[#allocation3 + $0x268] sm:$0xff]
    %v141 = vld [vmem:[#allocation3 + $0x270] sm:$0xff]
    %v142 = vld [vmem:[#allocation3 + $0x278] sm:$0xff]
    %v143 = vld [vmem:[#allocation3 + $0x280] sm:$0xff]
    %v144 = vld [vmem:[#allocation3 + $0x288] sm:$0xff]
    %v145 = vld [vmem:[#allocation3 + $0x290] sm:$0xff]
    %v146 = vld [vmem:[#allocation3 + $0x298] sm:$0xff]
    %v147 = vld [vmem:[#allocation3 + $0x2a0] sm:$0xff]
    %v148 = vld [vmem:[#allocation3 + $0x2a8] sm:$0xff]
    %v149 = vld [vmem:[#allocation3 + $0x2b0] sm:$0xff]
    %v150 = vld [vmem:[#allocation3 + $0x2b8] sm:$0xff]
    %v151 = vld [vmem:[#allocation3 + $0x2c0] sm:$0xff]
    %v152 = vld [vmem:[#allocation3 + $0x2c8] sm:$0xff]
    %v153 = vld [vmem:[#allocation3 + $0x2d0] sm:$0xff]
    %v154 = vld [vmem:[#allocation3 + $0x2d8] sm:$0xff]
    %v155 = vld [vmem:[#allocation3 + $0x2e0] sm:$0xff]
    %v156 = vld [vmem:[#allocation3 + $0x2e8] sm:$0xff]
    %v157 = vld [vmem:[#allocation3 + $0x2f0] sm:$0xff]
    %v158 = vld [vmem:[#allocation3 + $0x2f8] sm:$0xff]
    %v159 = vld [vmem:[%s2] sm:$0xf]
    %v160 = vunpack.c.l.bf16 %v159
    %v162 = vlaneseq
    %v163 = vshrl.u32 %v162, 7
    %v164 = vsub.s32 0, %v163
    %v165 = vrot.slane %v160, %v164
    %v166 = vlaneseq
    %v167 = vshrl.u32 %v166, 7
    %v168 = vsub.s32 2, %v167
    %v169 = vrot.slane %v160, %v168
    %v170 = vlaneseq
    %v171 = vshrl.u32 %v170, 7
    %v172 = vsub.s32 4, %v171
    %v173 = vrot.slane %v160, %v172
    %v174 = vlaneseq
    %v175 = vshrl.u32 %v174, 7
    %v176 = vsub.s32 6, %v175
    %v177 = vrot.slane %v160, %v176
    %v182 = vlaneseq
    %v183 = vshrl.u32 %v182, 7
    %v184 = vsub.s32 0, %v183
    %v185 = vrot.slane %v165, %v184
    %v186 = vlaneseq
    %v187 = vshrl.u32 %v186, 7
    %v188 = vsub.s32 0, %v187
    %v189 = vrot.slane %v169, %v188
    %v190 = vlaneseq
    %v191 = vshrl.u32 %v190, 7
    %v192 = vsub.s32 0, %v191
    %v193 = vrot.slane %v173, %v192
    %v194 = vlaneseq
    %v195 = vshrl.u32 %v194, 7
    %v196 = vsub.s32 0, %v195
    %v197 = vrot.slane %v177, %v196
    %v294 = vunpack.c.l.b16 %v63
    %v295 = vunpack.c.h.b16 %v63
    %v296 = vunpack.c.l.b16 %v64
    %v297 = vunpack.c.h.b16 %v64
    %v298 = vunpack.c.l.b16 %v65
    %v299 = vunpack.c.h.b16 %v65
    %v300 = vunpack.c.l.b16 %v66
    %v301 = vunpack.c.h.b16 %v66
    %v302 = vunpack.c.l.b16 %v67
    %v303 = vunpack.c.h.b16 %v67
    %v304 = vunpack.c.l.b16 %v68
    %v305 = vunpack.c.h.b16 %v68
    %v306 = vunpack.c.l.b16 %v69
    %v307 = vunpack.c.h.b16 %v69
    %v308 = vunpack.c.l.b16 %v70
    %v309 = vunpack.c.h.b16 %v70
    %v310 = vunpack.c.l.b16 %v71
    %v311 = vunpack.c.h.b16 %v71
    %v312 = vunpack.c.l.b16 %v72
    %v313 = vunpack.c.h.b16 %v72
    %v314 = vunpack.c.l.b16 %v73
    %v315 = vunpack.c.h.b16 %v73
    %v316 = vunpack.c.l.b16 %v74
    %v317 = vunpack.c.h.b16 %v74
    %v318 = vunpack.c.l.b16 %v75
    %v319 = vunpack.c.h.b16 %v75
    %v320 = vunpack.c.l.b16 %v76
    %v321 = vunpack.c.h.b16 %v76
    %v322 = vunpack.c.l.b16 %v77
    %v323 = vunpack.c.h.b16 %v77
    %v324 = vunpack.c.l.b16 %v78
    %v325 = vunpack.c.h.b16 %v78
    %v326 = vunpack.c.l.b16 %v79
    %v327 = vunpack.c.h.b16 %v79
    %v328 = vunpack.c.l.b16 %v80
    %v329 = vunpack.c.h.b16 %v80
    %v330 = vunpack.c.l.b16 %v81
    %v331 = vunpack.c.h.b16 %v81
    %v332 = vunpack.c.l.b16 %v82
    %v333 = vunpack.c.h.b16 %v82
    %v334 = vunpack.c.l.b16 %v83
    %v335 = vunpack.c.h.b16 %v83
    %v336 = vunpack.c.l.b16 %v84
    %v337 = vunpack.c.h.b16 %v84
    %v338 = vunpack.c.l.b16 %v85
    %v339 = vunpack.c.h.b16 %v85
    %v340 = vunpack.c.l.b16 %v86
    %v341 = vunpack.c.h.b16 %v86
    %v342 = vunpack.c.l.b16 %v87
    %v343 = vunpack.c.h.b16 %v87
    %v344 = vunpack.c.l.b16 %v88
    %v345 = vunpack.c.h.b16 %v88
    %v346 = vunpack.c.l.b16 %v89
    %v347 = vunpack.c.h.b16 %v89
    %v348 = vunpack.c.l.b16 %v90
    %v349 = vunpack.c.h.b16 %v90
    %v350 = vunpack.c.l.b16 %v91
    %v351 = vunpack.c.h.b16 %v91
    %v352 = vunpack.c.l.b16 %v92
    %v353 = vunpack.c.h.b16 %v92
    %v354 = vunpack.c.l.b16 %v93
    %v355 = vunpack.c.h.b16 %v93
    %v356 = vunpack.c.l.b16 %v94
    %v357 = vunpack.c.h.b16 %v94
    %v358 = vunpack.c.l.b16 %v95
    %v359 = vunpack.c.h.b16 %v95
    %v360 = vunpack.c.l.b16 %v96
    %v361 = vunpack.c.h.b16 %v96
    %v362 = vunpack.c.l.b16 %v97
    %v363 = vunpack.c.h.b16 %v97
    %v364 = vunpack.c.l.b16 %v98
    %v365 = vunpack.c.h.b16 %v98
    %v366 = vunpack.c.l.b16 %v99
    %v367 = vunpack.c.h.b16 %v99
    %v368 = vunpack.c.l.b16 %v100
    %v369 = vunpack.c.h.b16 %v100
    %v370 = vunpack.c.l.b16 %v101
    %v371 = vunpack.c.h.b16 %v101
    %v372 = vunpack.c.l.b16 %v102
    %v373 = vunpack.c.h.b16 %v102
    %v374 = vunpack.c.l.b16 %v103
    %v375 = vunpack.c.h.b16 %v103
    %v376 = vunpack.c.l.b16 %v104
    %v377 = vunpack.c.h.b16 %v104
    %v378 = vunpack.c.l.b16 %v105
    %v379 = vunpack.c.h.b16 %v105
    %v380 = vunpack.c.l.b16 %v106
    %v381 = vunpack.c.h.b16 %v106
    %v382 = vunpack.c.l.b16 %v107
    %v383 = vunpack.c.h.b16 %v107
    %v384 = vunpack.c.l.b16 %v108
    %v385 = vunpack.c.h.b16 %v108
    %v386 = vunpack.c.l.b16 %v109
    %v387 = vunpack.c.h.b16 %v109
    %v388 = vunpack.c.l.b16 %v110
    %v389 = vunpack.c.h.b16 %v110
    %v390 = vunpack.c.l.b16 %v111
    %v391 = vunpack.c.h.b16 %v111
    %v392 = vunpack.c.l.b16 %v112
    %v393 = vunpack.c.h.b16 %v112
    %v394 = vunpack.c.l.b16 %v113
    %v395 = vunpack.c.h.b16 %v113
    %v396 = vunpack.c.l.b16 %v114
    %v397 = vunpack.c.h.b16 %v114
    %v398 = vunpack.c.l.b16 %v115
    %v399 = vunpack.c.h.b16 %v115
    %v400 = vunpack.c.l.b16 %v116
    %v401 = vunpack.c.h.b16 %v116
    %v402 = vunpack.c.l.b16 %v117
    %v403 = vunpack.c.h.b16 %v117
    %v404 = vunpack.c.l.b16 %v118
    %v405 = vunpack.c.h.b16 %v118
    %v406 = vunpack.c.l.b16 %v119
    %v407 = vunpack.c.h.b16 %v119
    %v408 = vunpack.c.l.b16 %v120
    %v409 = vunpack.c.h.b16 %v120
    %v410 = vunpack.c.l.b16 %v121
    %v411 = vunpack.c.h.b16 %v121
    %v412 = vunpack.c.l.b16 %v122
    %v413 = vunpack.c.h.b16 %v122
    %v414 = vunpack.c.l.b16 %v123
    %v415 = vunpack.c.h.b16 %v123
    %v416 = vunpack.c.l.b16 %v124
    %v417 = vunpack.c.h.b16 %v124
    %v418 = vunpack.c.l.b16 %v125
    %v419 = vunpack.c.h.b16 %v125
    %v420 = vunpack.c.l.b16 %v126
    %v421 = vunpack.c.h.b16 %v126
    %v422 = vunpack.c.l.b16 %v127
    %v423 = vunpack.c.h.b16 %v127
    %v424 = vunpack.c.l.b16 %v128
    %v425 = vunpack.c.h.b16 %v128
    %v426 = vunpack.c.l.b16 %v129
    %v427 = vunpack.c.h.b16 %v129
    %v428 = vunpack.c.l.b16 %v130
    %v429 = vunpack.c.h.b16 %v130
    %v430 = vunpack.c.l.b16 %v131
    %v431 = vunpack.c.h.b16 %v131
    %v432 = vunpack.c.l.b16 %v132
    %v433 = vunpack.c.h.b16 %v132
    %v434 = vunpack.c.l.b16 %v133
    %v435 = vunpack.c.h.b16 %v133
    %v436 = vunpack.c.l.b16 %v134
    %v437 = vunpack.c.h.b16 %v134
    %v438 = vunpack.c.l.b16 %v135
    %v439 = vunpack.c.h.b16 %v135
    %v440 = vunpack.c.l.b16 %v136
    %v441 = vunpack.c.h.b16 %v136
    %v442 = vunpack.c.l.b16 %v137
    %v443 = vunpack.c.h.b16 %v137
    %v444 = vunpack.c.l.b16 %v138
    %v445 = vunpack.c.h.b16 %v138
    %v446 = vunpack.c.l.b16 %v139
    %v447 = vunpack.c.h.b16 %v139
    %v448 = vunpack.c.l.b16 %v140
    %v449 = vunpack.c.h.b16 %v140
    %v450 = vunpack.c.l.b16 %v141
    %v451 = vunpack.c.h.b16 %v141
    %v452 = vunpack.c.l.b16 %v142
    %v453 = vunpack.c.h.b16 %v142
    %v454 = vunpack.c.l.b16 %v143
    %v455 = vunpack.c.h.b16 %v143
    %v456 = vunpack.c.l.b16 %v144
    %v457 = vunpack.c.h.b16 %v144
    %v458 = vunpack.c.l.b16 %v145
    %v459 = vunpack.c.h.b16 %v145
    %v460 = vunpack.c.l.b16 %v146
    %v461 = vunpack.c.h.b16 %v146
    %v462 = vunpack.c.l.b16 %v147
    %v463 = vunpack.c.h.b16 %v147
    %v464 = vunpack.c.l.b16 %v148
    %v465 = vunpack.c.h.b16 %v148
    %v466 = vunpack.c.l.b16 %v149
    %v467 = vunpack.c.h.b16 %v149
    %v468 = vunpack.c.l.b16 %v150
    %v469 = vunpack.c.h.b16 %v150
    %v470 = vunpack.c.l.b16 %v151
    %v471 = vunpack.c.h.b16 %v151
    %v472 = vunpack.c.l.b16 %v152
    %v473 = vunpack.c.h.b16 %v152
    %v474 = vunpack.c.l.b16 %v153
    %v475 = vunpack.c.h.b16 %v153
    %v476 = vunpack.c.l.b16 %v154
    %v477 = vunpack.c.h.b16 %v154
    %v478 = vunpack.c.l.b16 %v155
    %v479 = vunpack.c.h.b16 %v155
    %v480 = vunpack.c.l.b16 %v156
    %v481 = vunpack.c.h.b16 %v156
    %v482 = vunpack.c.l.b16 %v157
    %v483 = vunpack.c.h.b16 %v157
    %v484 = vunpack.c.l.b16 %v158
    %v485 = vunpack.c.h.b16 %v158
    %v486 = vpack.c.b16 %v298, %v294
    %v487 = vpack.c.b16 %v299, %v295
    %v488 = vpack.c.b16 %v300, %v296
    %v489 = vpack.c.b16 %v301, %v297
    %v490 = vpack.c.b16 %v306, %v302
    %v491 = vpack.c.b16 %v307, %v303
    %v492 = vpack.c.b16 %v308, %v304
    %v493 = vpack.c.b16 %v309, %v305
    %v494 = vpack.c.b16 %v314, %v310
    %v495 = vpack.c.b16 %v315, %v311
    %v496 = vpack.c.b16 %v316, %v312
    %v497 = vpack.c.b16 %v317, %v313
    %v498 = vpack.c.b16 %v322, %v318
    %v499 = vpack.c.b16 %v323, %v319
    %v500 = vpack.c.b16 %v324, %v320
    %v501 = vpack.c.b16 %v325, %v321
    %v502 = vpack.c.b16 %v330, %v326
    %v503 = vpack.c.b16 %v331, %v327
    %v504 = vpack.c.b16 %v332, %v328
    %v505 = vpack.c.b16 %v333, %v329
    %v506 = vpack.c.b16 %v338, %v334
    %v507 = vpack.c.b16 %v339, %v335
    %v508 = vpack.c.b16 %v340, %v336
    %v509 = vpack.c.b16 %v341, %v337
    %v510 = vpack.c.b16 %v346, %v342
    %v511 = vpack.c.b16 %v347, %v343
    %v512 = vpack.c.b16 %v348, %v344
    %v513 = vpack.c.b16 %v349, %v345
    %v514 = vpack.c.b16 %v354, %v350
    %v515 = vpack.c.b16 %v355, %v351
    %v516 = vpack.c.b16 %v356, %v352
    %v517 = vpack.c.b16 %v357, %v353
    %v518 = vpack.c.b16 %v362, %v358
    %v519 = vpack.c.b16 %v363, %v359
    %v520 = vpack.c.b16 %v364, %v360
    %v521 = vpack.c.b16 %v365, %v361
    %v522 = vpack.c.b16 %v370, %v366
    %v523 = vpack.c.b16 %v371, %v367
    %v524 = vpack.c.b16 %v372, %v368
    %v525 = vpack.c.b16 %v373, %v369
    %v526 = vpack.c.b16 %v378, %v374
    %v527 = vpack.c.b16 %v379, %v375
    %v528 = vpack.c.b16 %v380, %v376
    %v529 = vpack.c.b16 %v381, %v377
    %v530 = vpack.c.b16 %v386, %v382
    %v531 = vpack.c.b16 %v387, %v383
    %v532 = vpack.c.b16 %v388, %v384
    %v533 = vpack.c.b16 %v389, %v385
    %v534 = vpack.c.b16 %v394, %v390
    %v535 = vpack.c.b16 %v395, %v391
    %v536 = vpack.c.b16 %v396, %v392
    %v537 = vpack.c.b16 %v397, %v393
    %v538 = vpack.c.b16 %v402, %v398
    %v539 = vpack.c.b16 %v403, %v399
    %v540 = vpack.c.b16 %v404, %v400
    %v541 = vpack.c.b16 %v405, %v401
    %v542 = vpack.c.b16 %v410, %v406
    %v543 = vpack.c.b16 %v411, %v407
    %v544 = vpack.c.b16 %v412, %v408
    %v545 = vpack.c.b16 %v413, %v409
    %v546 = vpack.c.b16 %v418, %v414
    %v547 = vpack.c.b16 %v419, %v415
    %v548 = vpack.c.b16 %v420, %v416
    %v549 = vpack.c.b16 %v421, %v417
    %v550 = vpack.c.b16 %v426, %v422
    %v551 = vpack.c.b16 %v427, %v423
    %v552 = vpack.c.b16 %v428, %v424
    %v553 = vpack.c.b16 %v429, %v425
    %v554 = vpack.c.b16 %v434, %v430
    %v555 = vpack.c.b16 %v435, %v431
    %v556 = vpack.c.b16 %v436, %v432
    %v557 = vpack.c.b16 %v437, %v433
    %v558 = vpack.c.b16 %v442, %v438
    %v559 = vpack.c.b16 %v443, %v439
    %v560 = vpack.c.b16 %v444, %v440
    %v561 = vpack.c.b16 %v445, %v441
    %v562 = vpack.c.b16 %v450, %v446
    %v563 = vpack.c.b16 %v451, %v447
    %v564 = vpack.c.b16 %v452, %v448
    %v565 = vpack.c.b16 %v453, %v449
    %v566 = vpack.c.b16 %v458, %v454
    %v567 = vpack.c.b16 %v459, %v455
    %v568 = vpack.c.b16 %v460, %v456
    %v569 = vpack.c.b16 %v461, %v457
    %v570 = vpack.c.b16 %v466, %v462
    %v571 = vpack.c.b16 %v467, %v463
    %v572 = vpack.c.b16 %v468, %v464
    %v573 = vpack.c.b16 %v469, %v465
    %v574 = vpack.c.b16 %v474, %v470
    %v575 = vpack.c.b16 %v475, %v471
    %v576 = vpack.c.b16 %v476, %v472
    %v577 = vpack.c.b16 %v477, %v473
    %v578 = vpack.c.b16 %v482, %v478
    %v579 = vpack.c.b16 %v483, %v479
    %v580 = vpack.c.b16 %v484, %v480
    %v581 = vpack.c.b16 %v485, %v481
    %678 = vmatprep.subr.bf16.mxu0 %v515
    %679 = vmatpush1.bf16.msra.mxu0 %v514
    %680 = vmatprep.subr.bf16.mxu0 %v511
    %681 = vmatpush1.bf16.msra.mxu0 %v510
    %682 = vmatprep.subr.bf16.mxu0 %v507
    %683 = vmatpush1.bf16.msra.mxu0 %v506
    %684 = vmatprep.subr.bf16.mxu0 %v503
    %685 = vmatpush1.bf16.msra.mxu0 %v502
    %686 = vmatprep.subr.bf16.mxu0 %v499
    %687 = vmatpush1.bf16.msra.mxu0 %v498
    %688 = vmatprep.subr.bf16.mxu0 %v495
    %689 = vmatpush1.bf16.msra.mxu0 %v494
    %690 = vmatprep.subr.bf16.mxu0 %v491
    %691 = vmatpush1.bf16.msra.mxu0 %v490
    %692 = vmatprep.subr.bf16.mxu0 %v487
    %693 = vmatpush1.bf16.msra.mxu0 %v486
    %694 = vmatprep.subr.bf16.mxu0 %v547
    %695 = vmatpush2.bf16.msra.mxu0 %v546
    %696 = vmatprep.subr.bf16.mxu0 %v543
    %697 = vmatpush2.bf16.msra.mxu0 %v542
    %698 = vmatprep.subr.bf16.mxu0 %v539
    %699 = vmatpush2.bf16.msra.mxu0 %v538
    %700 = vmatprep.subr.bf16.mxu0 %v535
    %701 = vmatpush2.bf16.msra.mxu0 %v534
    %702 = vmatprep.subr.bf16.mxu0 %v531
    %703 = vmatpush2.bf16.msra.mxu0 %v530
    %704 = vmatprep.subr.bf16.mxu0 %v527
    %705 = vmatpush2.bf16.msra.mxu0 %v526
    %706 = vmatprep.subr.bf16.mxu0 %v523
    %707 = vmatpush2.bf16.msra.mxu0 %v522
    %708 = vmatprep.subr.bf16.mxu0 %v519
    %709 = vmatpush2.bf16.msra.mxu0 %v518
    %710 = vmatprep.mubr.bf16.mxu0 %v61
    %711 = vmatmul.mubr.bf16.gmra.mxu0 %v60
    %v712 = vpop.f32.mrf.mxu0
    %v713 = vadd.f32 %v185, %v712
    %v714 = vpop.f32.mrf.mxu0
    %v715 = vadd.f32 %v189, %v714
    %v716 = vpop.f32.mrf.mxu0
    %v717 = vpop.f32.mrf.mxu0
    %718 = vdwg.mxu0
    %719 = vmatprep.subr.bf16.mxu0 %v579
    %720 = vmatpush1.bf16.msra.mxu0 %v578
    %721 = vmatprep.subr.bf16.mxu0 %v575
    %722 = vmatpush1.bf16.msra.mxu0 %v574
    %723 = vmatprep.subr.bf16.mxu0 %v571
    %724 = vmatpush1.bf16.msra.mxu0 %v570
    %725 = vmatprep.subr.bf16.mxu0 %v567
    %726 = vmatpush1.bf16.msra.mxu0 %v566
    %727 = vmatprep.subr.bf16.mxu0 %v563
    %728 = vmatpush1.bf16.msra.mxu0 %v562
    %729 = vmatprep.subr.bf16.mxu0 %v559
    %730 = vmatpush1.bf16.msra.mxu0 %v558
    %731 = vmatprep.subr.bf16.mxu0 %v555
    %732 = vmatpush1.bf16.msra.mxu0 %v554
    %733 = vmatprep.subr.bf16.mxu0 %v551
    %734 = vmatpush1.bf16.msra.mxu0 %v550
    %735 = vmatprep.subr.bf16.mxu0 0
    %736 = vmatpush2.bf16.msra.mxu0 0
    %737 = vmatprep.subr.bf16.mxu0 0
    %738 = vmatpush2.bf16.msra.mxu0 0
    %739 = vmatprep.subr.bf16.mxu0 0
    %740 = vmatpush2.bf16.msra.mxu0 0
    %741 = vmatprep.subr.bf16.mxu0 0
    %742 = vmatpush2.bf16.msra.mxu0 0
    %743 = vmatprep.subr.bf16.mxu0 0
    %744 = vmatpush2.bf16.msra.mxu0 0
    %745 = vmatprep.subr.bf16.mxu0 0
    %746 = vmatpush2.bf16.msra.mxu0 0
    %747 = vmatprep.subr.bf16.mxu0 0
    %748 = vmatpush2.bf16.msra.mxu0 0
    %749 = vmatprep.subr.bf16.mxu0 0
    %750 = vmatpush2.bf16.msra.mxu0 0
    %751 = vmatprep.mubr.bf16.mxu0 0
    %752 = vmatmul.mubr.bf16.gmra.mxu0 %v62
    %v753 = vpop.f32.mrf.mxu0
    %v754 = vadd.f32 %v713, %v753
    %v755 = vpop.f32.mrf.mxu0
    %v756 = vadd.f32 %v715, %v755
    %v757 = vpop.f32.mrf.mxu0
    %v758 = vpop.f32.mrf.mxu0
    %759 = vdwg.mxu0
    %760 = vmatprep.subr.bf16.mxu0 %v517
    %761 = vmatpush1.bf16.msra.mxu0 %v516
    %762 = vmatprep.subr.bf16.mxu0 %v513
    %763 = vmatpush1.bf16.msra.mxu0 %v512
    %764 = vmatprep.subr.bf16.mxu0 %v509
    %765 = vmatpush1.bf16.msra.mxu0 %v508
    %766 = vmatprep.subr.bf16.mxu0 %v505
    %767 = vmatpush1.bf16.msra.mxu0 %v504
    %768 = vmatprep.subr.bf16.mxu0 %v501
    %769 = vmatpush1.bf16.msra.mxu0 %v500
    %770 = vmatprep.subr.bf16.mxu0 %v497
    %771 = vmatpush1.bf16.msra.mxu0 %v496
    %772 = vmatprep.subr.bf16.mxu0 %v493
    %773 = vmatpush1.bf16.msra.mxu0 %v492
    %774 = vmatprep.subr.bf16.mxu0 %v489
    %775 = vmatpush1.bf16.msra.mxu0 %v488
    %776 = vmatprep.subr.bf16.mxu0 %v549
    %777 = vmatpush2.bf16.msra.mxu0 %v548
    %778 = vmatprep.subr.bf16.mxu0 %v545
    %779 = vmatpush2.bf16.msra.mxu0 %v544
    %780 = vmatprep.subr.bf16.mxu0 %v541
    %781 = vmatpush2.bf16.msra.mxu0 %v540
    %782 = vmatprep.subr.bf16.mxu0 %v537
    %783 = vmatpush2.bf16.msra.mxu0 %v536
    %784 = vmatprep.subr.bf16.mxu0 %v533
    %785 = vmatpush2.bf16.msra.mxu0 %v532
    %786 = vmatprep.subr.bf16.mxu0 %v529
    %787 = vmatpush2.bf16.msra.mxu0 %v528
    %788 = vmatprep.subr.bf16.mxu0 %v525
    %789 = vmatpush2.bf16.msra.mxu0 %v524
    %790 = vmatprep.subr.bf16.mxu0 %v521
    %791 = vmatpush2.bf16.msra.mxu0 %v520
    %792 = vmatprep.mubr.bf16.mxu0 %v61
    %793 = vmatmul.mubr.bf16.gmra.mxu0 %v60
    %v794 = vpop.f32.mrf.mxu0
    %v795 = vadd.f32 %v193, %v794
    %v796 = vpop.f32.mrf.mxu0
    %v797 = vadd.f32 %v197, %v796
    %v798 = vpop.f32.mrf.mxu0
    %v799 = vpop.f32.mrf.mxu0
    %800 = vdwg.mxu0
    %801 = vmatprep.subr.bf16.mxu0 %v581
    %802 = vmatpush1.bf16.msra.mxu0 %v580
    %803 = vmatprep.subr.bf16.mxu0 %v577
    %804 = vmatpush1.bf16.msra.mxu0 %v576
    %805 = vmatprep.subr.bf16.mxu0 %v573
    %806 = vmatpush1.bf16.msra.mxu0 %v572
    %807 = vmatprep.subr.bf16.mxu0 %v569
    %808 = vmatpush1.bf16.msra.mxu0 %v568
    %809 = vmatprep.subr.bf16.mxu0 %v565
    %810 = vmatpush1.bf16.msra.mxu0 %v564
    %811 = vmatprep.subr.bf16.mxu0 %v561
    %812 = vmatpush1.bf16.msra.mxu0 %v560
    %813 = vmatprep.subr.bf16.mxu0 %v557
    %814 = vmatpush1.bf16.msra.mxu0 %v556
    %815 = vmatprep.subr.bf16.mxu0 %v553
    %816 = vmatpush1.bf16.msra.mxu0 %v552
    %817 = vmatprep.subr.bf16.mxu0 0
    %818 = vmatpush2.bf16.msra.mxu0 0
    %819 = vmatprep.subr.bf16.mxu0 0
    %820 = vmatpush2.bf16.msra.mxu0 0
    %821 = vmatprep.subr.bf16.mxu0 0
    %822 = vmatpush2.bf16.msra.mxu0 0
    %823 = vmatprep.subr.bf16.mxu0 0
    %824 = vmatpush2.bf16.msra.mxu0 0
    %825 = vmatprep.subr.bf16.mxu0 0
    %826 = vmatpush2.bf16.msra.mxu0 0
    %827 = vmatprep.subr.bf16.mxu0 0
    %828 = vmatpush2.bf16.msra.mxu0 0
    %829 = vmatprep.subr.bf16.mxu0 0
    %830 = vmatpush2.bf16.msra.mxu0 0
    %831 = vmatprep.subr.bf16.mxu0 0
    %832 = vmatpush2.bf16.msra.mxu0 0
    %833 = vmatprep.mubr.bf16.mxu0 0
    %834 = vmatmul.mubr.bf16.gmra.mxu0 %v62
    %v835 = vpop.f32.mrf.mxu0
    %v836 = vadd.f32 %v795, %v835
    %v837 = vpop.f32.mrf.mxu0
    %v838 = vadd.f32 %v797, %v837
    %v839 = vpop.f32.mrf.mxu0
    %v840 = vpop.f32.mrf.mxu0
    %841 = vdwg.mxu0
    %v842 = vmul.f32 %v754, 0.2
    %v843 = vmul.f32 %v756, 0.2
    %v844 = vmul.f32 %v836, 0.2
    %v845 = vmul.f32 %v838, 0.2
    %v846 = vmax.f32 %v754, %v842
    %v847 = vmax.f32 %v756, %v843
    %v848 = vmax.f32 %v836, %v844
    %v849 = vmax.f32 %v838, %v845
    %v850 = vpack.c.bf16 %v846, %v846
    %v851 = vpack.c.bf16 %v847, %v847
    %v852 = vpack.c.bf16 %v848, %v848
    %v853 = vpack.c.bf16 %v849, %v849
    %v854 = vld [vmem:[#allocation5] sm:$0xff]
    %v855 = vld [vmem:[#allocation5 + $0x8] sm:$0xff]
    %v856 = vld [vmem:[#allocation5 + $0x10] sm:$0xff]
    %v857 = vld [vmem:[#allocation5 + $0x18] sm:$0xff]
    %v858 = vld [vmem:[#allocation5 + $0x20] sm:$0xff]
    %v859 = vld [vmem:[#allocation5 + $0x28] sm:$0xff]
    %v860 = vld [vmem:[#allocation5 + $0x30] sm:$0xff]
    %v861 = vld [vmem:[#allocation5 + $0x38] sm:$0xff]
    %v862 = vld [vmem:[#allocation5 + $0x40] sm:$0xff]
    %v863 = vld [vmem:[#allocation5 + $0x48] sm:$0xff]
    %v864 = vld [vmem:[#allocation5 + $0x50] sm:$0xff]
    %v865 = vld [vmem:[#allocation5 + $0x58] sm:$0xff]
    %v866 = vld [vmem:[#allocation5 + $0x60] sm:$0xff]
    %v867 = vld [vmem:[#allocation5 + $0x68] sm:$0xff]
    %v868 = vld [vmem:[#allocation5 + $0x70] sm:$0xff]
    %v869 = vld [vmem:[#allocation5 + $0x78] sm:$0xff]
    %v870 = vld [vmem:[#allocation5 + $0x80] sm:$0xff]
    %v871 = vld [vmem:[#allocation5 + $0x88] sm:$0xff]
    %v872 = vld [vmem:[#allocation5 + $0x90] sm:$0xff]
    %v873 = vld [vmem:[#allocation5 + $0x98] sm:$0xff]
    %v874 = vld [vmem:[#allocation5 + $0xa0] sm:$0xff]
    %v875 = vld [vmem:[#allocation5 + $0xa8] sm:$0xff]
    %v876 = vld [vmem:[#allocation5 + $0xb0] sm:$0xff]
    %v877 = vld [vmem:[#allocation5 + $0xb8] sm:$0xff]
    %v878 = vld [vmem:[#allocation5 + $0xc0] sm:$0xff]
    %v879 = vld [vmem:[#allocation5 + $0xc8] sm:$0xff]
    %v880 = vld [vmem:[#allocation5 + $0xd0] sm:$0xff]
    %v881 = vld [vmem:[#allocation5 + $0xd8] sm:$0xff]
    %v882 = vld [vmem:[#allocation5 + $0xe0] sm:$0xff]
    %v883 = vld [vmem:[#allocation5 + $0xe8] sm:$0xff]
    %v884 = vld [vmem:[#allocation5 + $0xf0] sm:$0xff]
    %v885 = vld [vmem:[#allocation5 + $0xf8] sm:$0xff]
    %v886 = vld [vmem:[#allocation5 + $0x100] sm:$0xff]
    %v887 = vld [vmem:[#allocation5 + $0x108] sm:$0xff]
    %v888 = vld [vmem:[#allocation5 + $0x110] sm:$0xff]
    %v889 = vld [vmem:[#allocation5 + $0x118] sm:$0xff]
    %v890 = vld [vmem:[#allocation5 + $0x120] sm:$0xff]
    %v891 = vld [vmem:[#allocation5 + $0x128] sm:$0xff]
    %v892 = vld [vmem:[#allocation5 + $0x130] sm:$0xff]
    %v893 = vld [vmem:[#allocation5 + $0x138] sm:$0xff]
    %v894 = vld [vmem:[#allocation5 + $0x140] sm:$0xff]
    %v895 = vld [vmem:[#allocation5 + $0x148] sm:$0xff]
    %v896 = vld [vmem:[#allocation5 + $0x150] sm:$0xff]
    %v897 = vld [vmem:[#allocation5 + $0x158] sm:$0xff]
    %v898 = vld [vmem:[#allocation5 + $0x160] sm:$0xff]
    %v899 = vld [vmem:[#allocation5 + $0x168] sm:$0xff]
    %v900 = vld [vmem:[#allocation5 + $0x170] sm:$0xff]
    %v901 = vld [vmem:[#allocation5 + $0x178] sm:$0xff]
    %v902 = vld [vmem:[#allocation5 + $0x180] sm:$0xff]
    %v903 = vld [vmem:[#allocation5 + $0x188] sm:$0xff]
    %v904 = vld [vmem:[#allocation5 + $0x190] sm:$0xff]
    %v905 = vld [vmem:[#allocation5 + $0x198] sm:$0xff]
    %v906 = vld [vmem:[#allocation5 + $0x1a0] sm:$0xff]
    %v907 = vld [vmem:[#allocation5 + $0x1a8] sm:$0xff]
    %v908 = vld [vmem:[#allocation5 + $0x1b0] sm:$0xff]
    %v909 = vld [vmem:[#allocation5 + $0x1b8] sm:$0xff]
    %v910 = vld [vmem:[#allocation5 + $0x1c0] sm:$0xff]
    %v911 = vld [vmem:[#allocation5 + $0x1c8] sm:$0xff]
    %v912 = vld [vmem:[#allocation5 + $0x1d0] sm:$0xff]
    %v913 = vld [vmem:[#allocation5 + $0x1d8] sm:$0xff]
    %v914 = vld [vmem:[#allocation5 + $0x1e0] sm:$0xff]
    %v915 = vld [vmem:[#allocation5 + $0x1e8] sm:$0xff]
    %v916 = vld [vmem:[#allocation5 + $0x1f0] sm:$0xff]
    %v917 = vld [vmem:[#allocation5 + $0x1f8] sm:$0xff]
    %v918 = vld [vmem:[#allocation5 + $0x200] sm:$0xff]
    %v919 = vld [vmem:[#allocation5 + $0x208] sm:$0xff]
    %v920 = vld [vmem:[#allocation5 + $0x210] sm:$0xff]
    %v921 = vld [vmem:[#allocation5 + $0x218] sm:$0xff]
    %v922 = vld [vmem:[#allocation5 + $0x220] sm:$0xff]
    %v923 = vld [vmem:[#allocation5 + $0x228] sm:$0xff]
    %v924 = vld [vmem:[#allocation5 + $0x230] sm:$0xff]
    %v925 = vld [vmem:[#allocation5 + $0x238] sm:$0xff]
    %v926 = vld [vmem:[#allocation5 + $0x240] sm:$0xff]
    %v927 = vld [vmem:[#allocation5 + $0x248] sm:$0xff]
    %v928 = vld [vmem:[#allocation5 + $0x250] sm:$0xff]
    %v929 = vld [vmem:[#allocation5 + $0x258] sm:$0xff]
    %v930 = vld [vmem:[#allocation5 + $0x260] sm:$0xff]
    %v931 = vld [vmem:[#allocation5 + $0x268] sm:$0xff]
    %v932 = vld [vmem:[#allocation5 + $0x270] sm:$0xff]
    %v933 = vld [vmem:[#allocation5 + $0x278] sm:$0xff]
    %v934 = vld [vmem:[#allocation5 + $0x280] sm:$0xff]
    %v935 = vld [vmem:[#allocation5 + $0x288] sm:$0xff]
    %v936 = vld [vmem:[#allocation5 + $0x290] sm:$0xff]
    %v937 = vld [vmem:[#allocation5 + $0x298] sm:$0xff]
    %v938 = vld [vmem:[#allocation5 + $0x2a0] sm:$0xff]
    %v939 = vld [vmem:[#allocation5 + $0x2a8] sm:$0xff]
    %v940 = vld [vmem:[#allocation5 + $0x2b0] sm:$0xff]
    %v941 = vld [vmem:[#allocation5 + $0x2b8] sm:$0xff]
    %v942 = vld [vmem:[#allocation5 + $0x2c0] sm:$0xff]
    %v943 = vld [vmem:[#allocation5 + $0x2c8] sm:$0xff]
    %v944 = vld [vmem:[#allocation5 + $0x2d0] sm:$0xff]
    %v945 = vld [vmem:[#allocation5 + $0x2d8] sm:$0xff]
    %v946 = vld [vmem:[#allocation5 + $0x2e0] sm:$0xff]
    %v947 = vld [vmem:[#allocation5 + $0x2e8] sm:$0xff]
    %v948 = vld [vmem:[#allocation5 + $0x2f0] sm:$0xff]
    %v949 = vld [vmem:[#allocation5 + $0x2f8] sm:$0xff]
    %v950 = vld [vmem:[#allocation5 + $0x300] sm:$0xff]
    %v951 = vld [vmem:[#allocation5 + $0x308] sm:$0xff]
    %v952 = vld [vmem:[#allocation5 + $0x310] sm:$0xff]
    %v953 = vld [vmem:[#allocation5 + $0x318] sm:$0xff]
    %v954 = vld [vmem:[#allocation5 + $0x320] sm:$0xff]
    %v955 = vld [vmem:[#allocation5 + $0x328] sm:$0xff]
    %v956 = vld [vmem:[#allocation5 + $0x330] sm:$0xff]
    %v957 = vld [vmem:[#allocation5 + $0x338] sm:$0xff]
    %v958 = vld [vmem:[#allocation5 + $0x340] sm:$0xff]
    %v959 = vld [vmem:[#allocation5 + $0x348] sm:$0xff]
    %v960 = vld [vmem:[#allocation5 + $0x350] sm:$0xff]
    %v961 = vld [vmem:[#allocation5 + $0x358] sm:$0xff]
    %v962 = vld [vmem:[#allocation5 + $0x360] sm:$0xff]
    %v963 = vld [vmem:[#allocation5 + $0x368] sm:$0xff]
    %v964 = vld [vmem:[#allocation5 + $0x370] sm:$0xff]
    %v965 = vld [vmem:[#allocation5 + $0x378] sm:$0xff]
    %v966 = vld [vmem:[#allocation5 + $0x380] sm:$0xff]
    %v967 = vld [vmem:[#allocation5 + $0x388] sm:$0xff]
    %v968 = vld [vmem:[#allocation5 + $0x390] sm:$0xff]
    %v969 = vld [vmem:[#allocation5 + $0x398] sm:$0xff]
    %v970 = vld [vmem:[#allocation5 + $0x3a0] sm:$0xff]
    %v971 = vld [vmem:[#allocation5 + $0x3a8] sm:$0xff]
    %v972 = vld [vmem:[#allocation5 + $0x3b0] sm:$0xff]
    %v973 = vld [vmem:[#allocation5 + $0x3b8] sm:$0xff]
    %v974 = vld [vmem:[#allocation5 + $0x3c0] sm:$0xff]
    %v975 = vld [vmem:[#allocation5 + $0x3c8] sm:$0xff]
    %v976 = vld [vmem:[#allocation5 + $0x3d0] sm:$0xff]
    %v977 = vld [vmem:[#allocation5 + $0x3d8] sm:$0xff]
    %v978 = vld [vmem:[#allocation5 + $0x3e0] sm:$0xff]
    %v979 = vld [vmem:[#allocation5 + $0x3e8] sm:$0xff]
    %v980 = vld [vmem:[#allocation5 + $0x3f0] sm:$0xff]
    %v981 = vld [vmem:[#allocation5 + $0x3f8] sm:$0xff]
    %v982 = vld [vmem:[%s4] sm:$0xf]
    %v983 = vunpack.c.l.bf16 %v982
    %v985 = vlaneseq
    %v986 = vshrl.u32 %v985, 7
    %v987 = vsub.s32 0, %v986
    %v988 = vrot.slane %v983, %v987
    %v989 = vlaneseq
    %v990 = vshrl.u32 %v989, 7
    %v991 = vsub.s32 2, %v990
    %v992 = vrot.slane %v983, %v991
    %v993 = vlaneseq
    %v994 = vshrl.u32 %v993, 7
    %v995 = vsub.s32 4, %v994
    %v996 = vrot.slane %v983, %v995
    %v997 = vlaneseq
    %v998 = vshrl.u32 %v997, 7
    %v999 = vsub.s32 6, %v998
    %v1000 = vrot.slane %v983, %v999
    %v1005 = vlaneseq
    %v1006 = vshrl.u32 %v1005, 7
    %v1007 = vsub.s32 0, %v1006
    %v1008 = vrot.slane %v988, %v1007
    %v1009 = vlaneseq
    %v1010 = vshrl.u32 %v1009, 7
    %v1011 = vsub.s32 0, %v1010
    %v1012 = vrot.slane %v992, %v1011
    %v1013 = vlaneseq
    %v1014 = vshrl.u32 %v1013, 7
    %v1015 = vsub.s32 0, %v1014
    %v1016 = vrot.slane %v996, %v1015
    %v1017 = vlaneseq
    %v1018 = vshrl.u32 %v1017, 7
    %v1019 = vsub.s32 0, %v1018
    %v1020 = vrot.slane %v1000, %v1019
    %v1149 = vunpack.c.l.b16 %v854
    %v1150 = vunpack.c.h.b16 %v854
    %v1151 = vunpack.c.l.b16 %v855
    %v1152 = vunpack.c.h.b16 %v855
    %v1153 = vunpack.c.l.b16 %v856
    %v1154 = vunpack.c.h.b16 %v856
    %v1155 = vunpack.c.l.b16 %v857
    %v1156 = vunpack.c.h.b16 %v857
    %v1157 = vunpack.c.l.b16 %v858
    %v1158 = vunpack.c.h.b16 %v858
    %v1159 = vunpack.c.l.b16 %v859
    %v1160 = vunpack.c.h.b16 %v859
    %v1161 = vunpack.c.l.b16 %v860
    %v1162 = vunpack.c.h.b16 %v860
    %v1163 = vunpack.c.l.b16 %v861
    %v1164 = vunpack.c.h.b16 %v861
    %v1165 = vunpack.c.l.b16 %v862
    %v1166 = vunpack.c.h.b16 %v862
    %v1167 = vunpack.c.l.b16 %v863
    %v1168 = vunpack.c.h.b16 %v863
    %v1169 = vunpack.c.l.b16 %v864
    %v1170 = vunpack.c.h.b16 %v864
    %v1171 = vunpack.c.l.b16 %v865
    %v1172 = vunpack.c.h.b16 %v865
    %v1173 = vunpack.c.l.b16 %v866
    %v1174 = vunpack.c.h.b16 %v866
    %v1175 = vunpack.c.l.b16 %v867
    %v1176 = vunpack.c.h.b16 %v867
    %v1177 = vunpack.c.l.b16 %v868
    %v1178 = vunpack.c.h.b16 %v868
    %v1179 = vunpack.c.l.b16 %v869
    %v1180 = vunpack.c.h.b16 %v869
    %v1181 = vunpack.c.l.b16 %v870
    %v1182 = vunpack.c.h.b16 %v870
    %v1183 = vunpack.c.l.b16 %v871
    %v1184 = vunpack.c.h.b16 %v871
    %v1185 = vunpack.c.l.b16 %v872
    %v1186 = vunpack.c.h.b16 %v872
    %v1187 = vunpack.c.l.b16 %v873
    %v1188 = vunpack.c.h.b16 %v873
    %v1189 = vunpack.c.l.b16 %v874
    %v1190 = vunpack.c.h.b16 %v874
    %v1191 = vunpack.c.l.b16 %v875
    %v1192 = vunpack.c.h.b16 %v875
    %v1193 = vunpack.c.l.b16 %v876
    %v1194 = vunpack.c.h.b16 %v876
    %v1195 = vunpack.c.l.b16 %v877
    %v1196 = vunpack.c.h.b16 %v877
    %v1197 = vunpack.c.l.b16 %v878
    %v1198 = vunpack.c.h.b16 %v878
    %v1199 = vunpack.c.l.b16 %v879
    %v1200 = vunpack.c.h.b16 %v879
    %v1201 = vunpack.c.l.b16 %v880
    %v1202 = vunpack.c.h.b16 %v880
    %v1203 = vunpack.c.l.b16 %v881
    %v1204 = vunpack.c.h.b16 %v881
    %v1205 = vunpack.c.l.b16 %v882
    %v1206 = vunpack.c.h.b16 %v882
    %v1207 = vunpack.c.l.b16 %v883
    %v1208 = vunpack.c.h.b16 %v883
    %v1209 = vunpack.c.l.b16 %v884
    %v1210 = vunpack.c.h.b16 %v884
    %v1211 = vunpack.c.l.b16 %v885
    %v1212 = vunpack.c.h.b16 %v885
    %v1213 = vunpack.c.l.b16 %v886
    %v1214 = vunpack.c.h.b16 %v886
    %v1215 = vunpack.c.l.b16 %v887
    %v1216 = vunpack.c.h.b16 %v887
    %v1217 = vunpack.c.l.b16 %v888
    %v1218 = vunpack.c.h.b16 %v888
    %v1219 = vunpack.c.l.b16 %v889
    %v1220 = vunpack.c.h.b16 %v889
    %v1221 = vunpack.c.l.b16 %v890
    %v1222 = vunpack.c.h.b16 %v890
    %v1223 = vunpack.c.l.b16 %v891
    %v1224 = vunpack.c.h.b16 %v891
    %v1225 = vunpack.c.l.b16 %v892
    %v1226 = vunpack.c.h.b16 %v892
    %v1227 = vunpack.c.l.b16 %v893
    %v1228 = vunpack.c.h.b16 %v893
    %v1229 = vunpack.c.l.b16 %v894
    %v1230 = vunpack.c.h.b16 %v894
    %v1231 = vunpack.c.l.b16 %v895
    %v1232 = vunpack.c.h.b16 %v895
    %v1233 = vunpack.c.l.b16 %v896
    %v1234 = vunpack.c.h.b16 %v896
    %v1235 = vunpack.c.l.b16 %v897
    %v1236 = vunpack.c.h.b16 %v897
    %v1237 = vunpack.c.l.b16 %v898
    %v1238 = vunpack.c.h.b16 %v898
    %v1239 = vunpack.c.l.b16 %v899
    %v1240 = vunpack.c.h.b16 %v899
    %v1241 = vunpack.c.l.b16 %v900
    %v1242 = vunpack.c.h.b16 %v900
    %v1243 = vunpack.c.l.b16 %v901
    %v1244 = vunpack.c.h.b16 %v901
    %v1245 = vunpack.c.l.b16 %v902
    %v1246 = vunpack.c.h.b16 %v902
    %v1247 = vunpack.c.l.b16 %v903
    %v1248 = vunpack.c.h.b16 %v903
    %v1249 = vunpack.c.l.b16 %v904
    %v1250 = vunpack.c.h.b16 %v904
    %v1251 = vunpack.c.l.b16 %v905
    %v1252 = vunpack.c.h.b16 %v905
    %v1253 = vunpack.c.l.b16 %v906
    %v1254 = vunpack.c.h.b16 %v906
    %v1255 = vunpack.c.l.b16 %v907
    %v1256 = vunpack.c.h.b16 %v907
    %v1257 = vunpack.c.l.b16 %v908
    %v1258 = vunpack.c.h.b16 %v908
    %v1259 = vunpack.c.l.b16 %v909
    %v1260 = vunpack.c.h.b16 %v909
    %v1261 = vunpack.c.l.b16 %v910
    %v1262 = vunpack.c.h.b16 %v910
    %v1263 = vunpack.c.l.b16 %v911
    %v1264 = vunpack.c.h.b16 %v911
    %v1265 = vunpack.c.l.b16 %v912
    %v1266 = vunpack.c.h.b16 %v912
    %v1267 = vunpack.c.l.b16 %v913
    %v1268 = vunpack.c.h.b16 %v913
    %v1269 = vunpack.c.l.b16 %v914
    %v1270 = vunpack.c.h.b16 %v914
    %v1271 = vunpack.c.l.b16 %v915
    %v1272 = vunpack.c.h.b16 %v915
    %v1273 = vunpack.c.l.b16 %v916
    %v1274 = vunpack.c.h.b16 %v916
    %v1275 = vunpack.c.l.b16 %v917
    %v1276 = vunpack.c.h.b16 %v917
    %v1277 = vunpack.c.l.b16 %v918
    %v1278 = vunpack.c.h.b16 %v918
    %v1279 = vunpack.c.l.b16 %v919
    %v1280 = vunpack.c.h.b16 %v919
    %v1281 = vunpack.c.l.b16 %v920
    %v1282 = vunpack.c.h.b16 %v920
    %v1283 = vunpack.c.l.b16 %v921
    %v1284 = vunpack.c.h.b16 %v921
    %v1285 = vunpack.c.l.b16 %v922
    %v1286 = vunpack.c.h.b16 %v922
    %v1287 = vunpack.c.l.b16 %v923
    %v1288 = vunpack.c.h.b16 %v923
    %v1289 = vunpack.c.l.b16 %v924
    %v1290 = vunpack.c.h.b16 %v924
    %v1291 = vunpack.c.l.b16 %v925
    %v1292 = vunpack.c.h.b16 %v925
    %v1293 = vunpack.c.l.b16 %v926
    %v1294 = vunpack.c.h.b16 %v926
    %v1295 = vunpack.c.l.b16 %v927
    %v1296 = vunpack.c.h.b16 %v927
    %v1297 = vunpack.c.l.b16 %v928
    %v1298 = vunpack.c.h.b16 %v928
    %v1299 = vunpack.c.l.b16 %v929
    %v1300 = vunpack.c.h.b16 %v929
    %v1301 = vunpack.c.l.b16 %v930
    %v1302 = vunpack.c.h.b16 %v930
    %v1303 = vunpack.c.l.b16 %v931
    %v1304 = vunpack.c.h.b16 %v931
    %v1305 = vunpack.c.l.b16 %v932
    %v1306 = vunpack.c.h.b16 %v932
    %v1307 = vunpack.c.l.b16 %v933
    %v1308 = vunpack.c.h.b16 %v933
    %v1309 = vunpack.c.l.b16 %v934
    %v1310 = vunpack.c.h.b16 %v934
    %v1311 = vunpack.c.l.b16 %v935
    %v1312 = vunpack.c.h.b16 %v935
    %v1313 = vunpack.c.l.b16 %v936
    %v1314 = vunpack.c.h.b16 %v936
    %v1315 = vunpack.c.l.b16 %v937
    %v1316 = vunpack.c.h.b16 %v937
    %v1317 = vunpack.c.l.b16 %v938
    %v1318 = vunpack.c.h.b16 %v938
    %v1319 = vunpack.c.l.b16 %v939
    %v1320 = vunpack.c.h.b16 %v939
    %v1321 = vunpack.c.l.b16 %v940
    %v1322 = vunpack.c.h.b16 %v940
    %v1323 = vunpack.c.l.b16 %v941
    %v1324 = vunpack.c.h.b16 %v941
    %v1325 = vunpack.c.l.b16 %v942
    %v1326 = vunpack.c.h.b16 %v942
    %v1327 = vunpack.c.l.b16 %v943
    %v1328 = vunpack.c.h.b16 %v943
    %v1329 = vunpack.c.l.b16 %v944
    %v1330 = vunpack.c.h.b16 %v944
    %v1331 = vunpack.c.l.b16 %v945
    %v1332 = vunpack.c.h.b16 %v945
    %v1333 = vunpack.c.l.b16 %v946
    %v1334 = vunpack.c.h.b16 %v946
    %v1335 = vunpack.c.l.b16 %v947
    %v1336 = vunpack.c.h.b16 %v947
    %v1337 = vunpack.c.l.b16 %v948
    %v1338 = vunpack.c.h.b16 %v948
    %v1339 = vunpack.c.l.b16 %v949
    %v1340 = vunpack.c.h.b16 %v949
    %v1341 = vunpack.c.l.b16 %v950
    %v1342 = vunpack.c.h.b16 %v950
    %v1343 = vunpack.c.l.b16 %v951
    %v1344 = vunpack.c.h.b16 %v951
    %v1345 = vunpack.c.l.b16 %v952
    %v1346 = vunpack.c.h.b16 %v952
    %v1347 = vunpack.c.l.b16 %v953
    %v1348 = vunpack.c.h.b16 %v953
    %v1349 = vunpack.c.l.b16 %v954
    %v1350 = vunpack.c.h.b16 %v954
    %v1351 = vunpack.c.l.b16 %v955
    %v1352 = vunpack.c.h.b16 %v955
    %v1353 = vunpack.c.l.b16 %v956
    %v1354 = vunpack.c.h.b16 %v956
    %v1355 = vunpack.c.l.b16 %v957
    %v1356 = vunpack.c.h.b16 %v957
    %v1357 = vunpack.c.l.b16 %v958
    %v1358 = vunpack.c.h.b16 %v958
    %v1359 = vunpack.c.l.b16 %v959
    %v1360 = vunpack.c.h.b16 %v959
    %v1361 = vunpack.c.l.b16 %v960
    %v1362 = vunpack.c.h.b16 %v960
    %v1363 = vunpack.c.l.b16 %v961
    %v1364 = vunpack.c.h.b16 %v961
    %v1365 = vunpack.c.l.b16 %v962
    %v1366 = vunpack.c.h.b16 %v962
    %v1367 = vunpack.c.l.b16 %v963
    %v1368 = vunpack.c.h.b16 %v963
    %v1369 = vunpack.c.l.b16 %v964
    %v1370 = vunpack.c.h.b16 %v964
    %v1371 = vunpack.c.l.b16 %v965
    %v1372 = vunpack.c.h.b16 %v965
    %v1373 = vunpack.c.l.b16 %v966
    %v1374 = vunpack.c.h.b16 %v966
    %v1375 = vunpack.c.l.b16 %v967
    %v1376 = vunpack.c.h.b16 %v967
    %v1377 = vunpack.c.l.b16 %v968
    %v1378 = vunpack.c.h.b16 %v968
    %v1379 = vunpack.c.l.b16 %v969
    %v1380 = vunpack.c.h.b16 %v969
    %v1381 = vunpack.c.l.b16 %v970
    %v1382 = vunpack.c.h.b16 %v970
    %v1383 = vunpack.c.l.b16 %v971
    %v1384 = vunpack.c.h.b16 %v971
    %v1385 = vunpack.c.l.b16 %v972
    %v1386 = vunpack.c.h.b16 %v972
    %v1387 = vunpack.c.l.b16 %v973
    %v1388 = vunpack.c.h.b16 %v973
    %v1389 = vunpack.c.l.b16 %v974
    %v1390 = vunpack.c.h.b16 %v974
    %v1391 = vunpack.c.l.b16 %v975
    %v1392 = vunpack.c.h.b16 %v975
    %v1393 = vunpack.c.l.b16 %v976
    %v1394 = vunpack.c.h.b16 %v976
    %v1395 = vunpack.c.l.b16 %v977
    %v1396 = vunpack.c.h.b16 %v977
    %v1397 = vunpack.c.l.b16 %v978
    %v1398 = vunpack.c.h.b16 %v978
    %v1399 = vunpack.c.l.b16 %v979
    %v1400 = vunpack.c.h.b16 %v979
    %v1401 = vunpack.c.l.b16 %v980
    %v1402 = vunpack.c.h.b16 %v980
    %v1403 = vunpack.c.l.b16 %v981
    %v1404 = vunpack.c.h.b16 %v981
    %v1405 = vpack.c.b16 %v1153, %v1149
    %v1406 = vpack.c.b16 %v1154, %v1150
    %v1407 = vpack.c.b16 %v1155, %v1151
    %v1408 = vpack.c.b16 %v1156, %v1152
    %v1409 = vpack.c.b16 %v1161, %v1157
    %v1410 = vpack.c.b16 %v1162, %v1158
    %v1411 = vpack.c.b16 %v1163, %v1159
    %v1412 = vpack.c.b16 %v1164, %v1160
    %v1413 = vpack.c.b16 %v1169, %v1165
    %v1414 = vpack.c.b16 %v1170, %v1166
    %v1415 = vpack.c.b16 %v1171, %v1167
    %v1416 = vpack.c.b16 %v1172, %v1168
    %v1417 = vpack.c.b16 %v1177, %v1173
    %v1418 = vpack.c.b16 %v1178, %v1174
    %v1419 = vpack.c.b16 %v1179, %v1175
    %v1420 = vpack.c.b16 %v1180, %v1176
    %v1421 = vpack.c.b16 %v1185, %v1181
    %v1422 = vpack.c.b16 %v1186, %v1182
    %v1423 = vpack.c.b16 %v1187, %v1183
    %v1424 = vpack.c.b16 %v1188, %v1184
    %v1425 = vpack.c.b16 %v1193, %v1189
    %v1426 = vpack.c.b16 %v1194, %v1190
    %v1427 = vpack.c.b16 %v1195, %v1191
    %v1428 = vpack.c.b16 %v1196, %v1192
    %v1429 = vpack.c.b16 %v1201, %v1197
    %v1430 = vpack.c.b16 %v1202, %v1198
    %v1431 = vpack.c.b16 %v1203, %v1199
    %v1432 = vpack.c.b16 %v1204, %v1200
    %v1433 = vpack.c.b16 %v1209, %v1205
    %v1434 = vpack.c.b16 %v1210, %v1206
    %v1435 = vpack.c.b16 %v1211, %v1207
    %v1436 = vpack.c.b16 %v1212, %v1208
    %v1437 = vpack.c.b16 %v1217, %v1213
    %v1438 = vpack.c.b16 %v1218, %v1214
    %v1439 = vpack.c.b16 %v1219, %v1215
    %v1440 = vpack.c.b16 %v1220, %v1216
    %v1441 = vpack.c.b16 %v1225, %v1221
    %v1442 = vpack.c.b16 %v1226, %v1222
    %v1443 = vpack.c.b16 %v1227, %v1223
    %v1444 = vpack.c.b16 %v1228, %v1224
    %v1445 = vpack.c.b16 %v1233, %v1229
    %v1446 = vpack.c.b16 %v1234, %v1230
    %v1447 = vpack.c.b16 %v1235, %v1231
    %v1448 = vpack.c.b16 %v1236, %v1232
    %v1449 = vpack.c.b16 %v1241, %v1237
    %v1450 = vpack.c.b16 %v1242, %v1238
    %v1451 = vpack.c.b16 %v1243, %v1239
    %v1452 = vpack.c.b16 %v1244, %v1240
    %v1453 = vpack.c.b16 %v1249, %v1245
    %v1454 = vpack.c.b16 %v1250, %v1246
    %v1455 = vpack.c.b16 %v1251, %v1247
    %v1456 = vpack.c.b16 %v1252, %v1248
    %v1457 = vpack.c.b16 %v1257, %v1253
    %v1458 = vpack.c.b16 %v1258, %v1254
    %v1459 = vpack.c.b16 %v1259, %v1255
    %v1460 = vpack.c.b16 %v1260, %v1256
    %v1461 = vpack.c.b16 %v1265, %v1261
    %v1462 = vpack.c.b16 %v1266, %v1262
    %v1463 = vpack.c.b16 %v1267, %v1263
    %v1464 = vpack.c.b16 %v1268, %v1264
    %v1465 = vpack.c.b16 %v1273, %v1269
    %v1466 = vpack.c.b16 %v1274, %v1270
    %v1467 = vpack.c.b16 %v1275, %v1271
    %v1468 = vpack.c.b16 %v1276, %v1272
    %v1469 = vpack.c.b16 %v1281, %v1277
    %v1470 = vpack.c.b16 %v1282, %v1278
    %v1471 = vpack.c.b16 %v1283, %v1279
    %v1472 = vpack.c.b16 %v1284, %v1280
    %v1473 = vpack.c.b16 %v1289, %v1285
    %v1474 = vpack.c.b16 %v1290, %v1286
    %v1475 = vpack.c.b16 %v1291, %v1287
    %v1476 = vpack.c.b16 %v1292, %v1288
    %v1477 = vpack.c.b16 %v1297, %v1293
    %v1478 = vpack.c.b16 %v1298, %v1294
    %v1479 = vpack.c.b16 %v1299, %v1295
    %v1480 = vpack.c.b16 %v1300, %v1296
    %v1481 = vpack.c.b16 %v1305, %v1301
    %v1482 = vpack.c.b16 %v1306, %v1302
    %v1483 = vpack.c.b16 %v1307, %v1303
    %v1484 = vpack.c.b16 %v1308, %v1304
    %v1485 = vpack.c.b16 %v1313, %v1309
    %v1486 = vpack.c.b16 %v1314, %v1310
    %v1487 = vpack.c.b16 %v1315, %v1311
    %v1488 = vpack.c.b16 %v1316, %v1312
    %v1489 = vpack.c.b16 %v1321, %v1317
    %v1490 = vpack.c.b16 %v1322, %v1318
    %v1491 = vpack.c.b16 %v1323, %v1319
    %v1492 = vpack.c.b16 %v1324, %v1320
    %v1493 = vpack.c.b16 %v1329, %v1325
    %v1494 = vpack.c.b16 %v1330, %v1326
    %v1495 = vpack.c.b16 %v1331, %v1327
    %v1496 = vpack.c.b16 %v1332, %v1328
    %v1497 = vpack.c.b16 %v1337, %v1333
    %v1498 = vpack.c.b16 %v1338, %v1334
    %v1499 = vpack.c.b16 %v1339, %v1335
    %v1500 = vpack.c.b16 %v1340, %v1336
    %v1501 = vpack.c.b16 %v1345, %v1341
    %v1502 = vpack.c.b16 %v1346, %v1342
    %v1503 = vpack.c.b16 %v1347, %v1343
    %v1504 = vpack.c.b16 %v1348, %v1344
    %v1505 = vpack.c.b16 %v1353, %v1349
    %v1506 = vpack.c.b16 %v1354, %v1350
    %v1507 = vpack.c.b16 %v1355, %v1351
    %v1508 = vpack.c.b16 %v1356, %v1352
    %v1509 = vpack.c.b16 %v1361, %v1357
    %v1510 = vpack.c.b16 %v1362, %v1358
    %v1511 = vpack.c.b16 %v1363, %v1359
    %v1512 = vpack.c.b16 %v1364, %v1360
    %v1513 = vpack.c.b16 %v1369, %v1365
    %v1514 = vpack.c.b16 %v1370, %v1366
    %v1515 = vpack.c.b16 %v1371, %v1367
    %v1516 = vpack.c.b16 %v1372, %v1368
    %v1517 = vpack.c.b16 %v1377, %v1373
    %v1518 = vpack.c.b16 %v1378, %v1374
    %v1519 = vpack.c.b16 %v1379, %v1375
    %v1520 = vpack.c.b16 %v1380, %v1376
    %v1521 = vpack.c.b16 %v1385, %v1381
    %v1522 = vpack.c.b16 %v1386, %v1382
    %v1523 = vpack.c.b16 %v1387, %v1383
    %v1524 = vpack.c.b16 %v1388, %v1384
    %v1525 = vpack.c.b16 %v1393, %v1389
    %v1526 = vpack.c.b16 %v1394, %v1390
    %v1527 = vpack.c.b16 %v1395, %v1391
    %v1528 = vpack.c.b16 %v1396, %v1392
    %v1529 = vpack.c.b16 %v1401, %v1397
    %v1530 = vpack.c.b16 %v1402, %v1398
    %v1531 = vpack.c.b16 %v1403, %v1399
    %v1532 = vpack.c.b16 %v1404, %v1400
    %1661 = vmatprep.subr.bf16.mxu0 %v1434
    %1662 = vmatpush1.bf16.msra.mxu0 %v1433
    %1663 = vmatprep.subr.bf16.mxu0 %v1430
    %1664 = vmatpush1.bf16.msra.mxu0 %v1429
    %1665 = vmatprep.subr.bf16.mxu0 %v1426
    %1666 = vmatpush1.bf16.msra.mxu0 %v1425
    %1667 = vmatprep.subr.bf16.mxu0 %v1422
    %1668 = vmatpush1.bf16.msra.mxu0 %v1421
    %1669 = vmatprep.subr.bf16.mxu0 %v1418
    %1670 = vmatpush1.bf16.msra.mxu0 %v1417
    %1671 = vmatprep.subr.bf16.mxu0 %v1414
    %1672 = vmatpush1.bf16.msra.mxu0 %v1413
    %1673 = vmatprep.subr.bf16.mxu0 %v1410
    %1674 = vmatpush1.bf16.msra.mxu0 %v1409
    %1675 = vmatprep.subr.bf16.mxu0 %v1406
    %1676 = vmatpush1.bf16.msra.mxu0 %v1405
    %1677 = vmatprep.subr.bf16.mxu0 %v1466
    %1678 = vmatpush2.bf16.msra.mxu0 %v1465
    %1679 = vmatprep.subr.bf16.mxu0 %v1462
    %1680 = vmatpush2.bf16.msra.mxu0 %v1461
    %1681 = vmatprep.subr.bf16.mxu0 %v1458
    %1682 = vmatpush2.bf16.msra.mxu0 %v1457
    %1683 = vmatprep.subr.bf16.mxu0 %v1454
    %1684 = vmatpush2.bf16.msra.mxu0 %v1453
    %1685 = vmatprep.subr.bf16.mxu0 %v1450
    %1686 = vmatpush2.bf16.msra.mxu0 %v1449
    %1687 = vmatprep.subr.bf16.mxu0 %v1446
    %1688 = vmatpush2.bf16.msra.mxu0 %v1445
    %1689 = vmatprep.subr.bf16.mxu0 %v1442
    %1690 = vmatpush2.bf16.msra.mxu0 %v1441
    %1691 = vmatprep.subr.bf16.mxu0 %v1438
    %1692 = vmatpush2.bf16.msra.mxu0 %v1437
    %1693 = vmatprep.mubr.bf16.mxu0 %v851
    %1694 = vmatmul.mubr.bf16.gmra.mxu0 %v850
    %v1695 = vpop.f32.mrf.mxu0
    %v1696 = vadd.f32 %v1008, %v1695
    %v1697 = vpop.f32.mrf.mxu0
    %v1698 = vadd.f32 %v1012, %v1697
    %v1699 = vpop.f32.mrf.mxu0
    %v1700 = vpop.f32.mrf.mxu0
    %1701 = vdwg.mxu0
    %1702 = vmatprep.subr.bf16.mxu0 %v1498
    %1703 = vmatpush1.bf16.msra.mxu0 %v1497
    %1704 = vmatprep.subr.bf16.mxu0 %v1494
    %1705 = vmatpush1.bf16.msra.mxu0 %v1493
    %1706 = vmatprep.subr.bf16.mxu0 %v1490
    %1707 = vmatpush1.bf16.msra.mxu0 %v1489
    %1708 = vmatprep.subr.bf16.mxu0 %v1486
    %1709 = vmatpush1.bf16.msra.mxu0 %v1485
    %1710 = vmatprep.subr.bf16.mxu0 %v1482
    %1711 = vmatpush1.bf16.msra.mxu0 %v1481
    %1712 = vmatprep.subr.bf16.mxu0 %v1478
    %1713 = vmatpush1.bf16.msra.mxu0 %v1477
    %1714 = vmatprep.subr.bf16.mxu0 %v1474
    %1715 = vmatpush1.bf16.msra.mxu0 %v1473
    %1716 = vmatprep.subr.bf16.mxu0 %v1470
    %1717 = vmatpush1.bf16.msra.mxu0 %v1469
    %1718 = vmatprep.subr.bf16.mxu0 %v1530
    %1719 = vmatpush2.bf16.msra.mxu0 %v1529
    %1720 = vmatprep.subr.bf16.mxu0 %v1526
    %1721 = vmatpush2.bf16.msra.mxu0 %v1525
    %1722 = vmatprep.subr.bf16.mxu0 %v1522
    %1723 = vmatpush2.bf16.msra.mxu0 %v1521
    %1724 = vmatprep.subr.bf16.mxu0 %v1518
    %1725 = vmatpush2.bf16.msra.mxu0 %v1517
    %1726 = vmatprep.subr.bf16.mxu0 %v1514
    %1727 = vmatpush2.bf16.msra.mxu0 %v1513
    %1728 = vmatprep.subr.bf16.mxu0 %v1510
    %1729 = vmatpush2.bf16.msra.mxu0 %v1509
    %1730 = vmatprep.subr.bf16.mxu0 %v1506
    %1731 = vmatpush2.bf16.msra.mxu0 %v1505
    %1732 = vmatprep.subr.bf16.mxu0 %v1502
    %1733 = vmatpush2.bf16.msra.mxu0 %v1501
    %1734 = vmatprep.mubr.bf16.mxu0 %v853
    %1735 = vmatmul.mubr.bf16.gmra.mxu0 %v852
    %v1736 = vpop.f32.mrf.mxu0
    %v1737 = vadd.f32 %v1696, %v1736
    %v1738 = vpop.f32.mrf.mxu0
    %v1739 = vadd.f32 %v1698, %v1738
    %v1740 = vpop.f32.mrf.mxu0
    %v1741 = vpop.f32.mrf.mxu0
    %1742 = vdwg.mxu0
    %1743 = vmatprep.subr.bf16.mxu0 %v1436
    %1744 = vmatpush1.bf16.msra.mxu0 %v1435
    %1745 = vmatprep.subr.bf16.mxu0 %v1432
    %1746 = vmatpush1.bf16.msra.mxu0 %v1431
    %1747 = vmatprep.subr.bf16.mxu0 %v1428
    %1748 = vmatpush1.bf16.msra.mxu0 %v1427
    %1749 = vmatprep.subr.bf16.mxu0 %v1424
    %1750 = vmatpush1.bf16.msra.mxu0 %v1423
    %1751 = vmatprep.subr.bf16.mxu0 %v1420
    %1752 = vmatpush1.bf16.msra.mxu0 %v1419
    %1753 = vmatprep.subr.bf16.mxu0 %v1416
    %1754 = vmatpush1.bf16.msra.mxu0 %v1415
    %1755 = vmatprep.subr.bf16.mxu0 %v1412
    %1756 = vmatpush1.bf16.msra.mxu0 %v1411
    %1757 = vmatprep.subr.bf16.mxu0 %v1408
    %1758 = vmatpush1.bf16.msra.mxu0 %v1407
    %1759 = vmatprep.subr.bf16.mxu0 %v1468
    %1760 = vmatpush2.bf16.msra.mxu0 %v1467
    %1761 = vmatprep.subr.bf16.mxu0 %v1464
    %1762 = vmatpush2.bf16.msra.mxu0 %v1463
    %1763 = vmatprep.subr.bf16.mxu0 %v1460
    %1764 = vmatpush2.bf16.msra.mxu0 %v1459
    %1765 = vmatprep.subr.bf16.mxu0 %v1456
    %1766 = vmatpush2.bf16.msra.mxu0 %v1455
    %1767 = vmatprep.subr.bf16.mxu0 %v1452
    %1768 = vmatpush2.bf16.msra.mxu0 %v1451
    %1769 = vmatprep.subr.bf16.mxu0 %v1448
    %1770 = vmatpush2.bf16.msra.mxu0 %v1447
    %1771 = vmatprep.subr.bf16.mxu0 %v1444
    %1772 = vmatpush2.bf16.msra.mxu0 %v1443
    %1773 = vmatprep.subr.bf16.mxu0 %v1440
    %1774 = vmatpush2.bf16.msra.mxu0 %v1439
    %1775 = vmatprep.mubr.bf16.mxu0 %v851
    %1776 = vmatmul.mubr.bf16.gmra.mxu0 %v850
    %v1777 = vpop.f32.mrf.mxu0
    %v1778 = vadd.f32 %v1016, %v1777
    %v1779 = vpop.f32.mrf.mxu0
    %v1780 = vadd.f32 %v1020, %v1779
    %v1781 = vpop.f32.mrf.mxu0
    %v1782 = vpop.f32.mrf.mxu0
    %1783 = vdwg.mxu0
    %1784 = vmatprep.subr.bf16.mxu0 %v1500
    %1785 = vmatpush1.bf16.msra.mxu0 %v1499
    %1786 = vmatprep.subr.bf16.mxu0 %v1496
    %1787 = vmatpush1.bf16.msra.mxu0 %v1495
    %1788 = vmatprep.subr.bf16.mxu0 %v1492
    %1789 = vmatpush1.bf16.msra.mxu0 %v1491
    %1790 = vmatprep.subr.bf16.mxu0 %v1488
    %1791 = vmatpush1.bf16.msra.mxu0 %v1487
    %1792 = vmatprep.subr.bf16.mxu0 %v1484
    %1793 = vmatpush1.bf16.msra.mxu0 %v1483
    %1794 = vmatprep.subr.bf16.mxu0 %v1480
    %1795 = vmatpush1.bf16.msra.mxu0 %v1479
    %1796 = vmatprep.subr.bf16.mxu0 %v1476
    %1797 = vmatpush1.bf16.msra.mxu0 %v1475
    %1798 = vmatprep.subr.bf16.mxu0 %v1472
    %1799 = vmatpush1.bf16.msra.mxu0 %v1471
    %1800 = vmatprep.subr.bf16.mxu0 %v1532
    %1801 = vmatpush2.bf16.msra.mxu0 %v1531
    %1802 = vmatprep.subr.bf16.mxu0 %v1528
    %1803 = vmatpush2.bf16.msra.mxu0 %v1527
    %1804 = vmatprep.subr.bf16.mxu0 %v1524
    %1805 = vmatpush2.bf16.msra.mxu0 %v1523
    %1806 = vmatprep.subr.bf16.mxu0 %v1520
    %1807 = vmatpush2.bf16.msra.mxu0 %v1519
    %1808 = vmatprep.subr.bf16.mxu0 %v1516
    %1809 = vmatpush2.bf16.msra.mxu0 %v1515
    %1810 = vmatprep.subr.bf16.mxu0 %v1512
    %1811 = vmatpush2.bf16.msra.mxu0 %v1511
    %1812 = vmatprep.subr.bf16.mxu0 %v1508
    %1813 = vmatpush2.bf16.msra.mxu0 %v1507
    %1814 = vmatprep.subr.bf16.mxu0 %v1504
    %1815 = vmatpush2.bf16.msra.mxu0 %v1503
    %1816 = vmatprep.mubr.bf16.mxu0 %v853
    %1817 = vmatmul.mubr.bf16.gmra.mxu0 %v852
    %v1818 = vpop.f32.mrf.mxu0
    %v1819 = vadd.f32 %v1778, %v1818
    %v1820 = vpop.f32.mrf.mxu0
    %v1821 = vadd.f32 %v1780, %v1820
    %v1822 = vpop.f32.mrf.mxu0
    %v1823 = vpop.f32.mrf.mxu0
    %1824 = vdwg.mxu0
    %v1825 = vmul.f32 %v1737, 0.2
    %v1826 = vmul.f32 %v1739, 0.2
    %v1827 = vmul.f32 %v1819, 0.2
    %v1828 = vmul.f32 %v1821, 0.2
    %v1829 = vmax.f32 %v1737, %v1825
    %v1830 = vmax.f32 %v1739, %v1826
    %v1831 = vmax.f32 %v1819, %v1827
    %v1832 = vmax.f32 %v1821, %v1828
    %v1833 = vpack.c.bf16 %v1829, %v1829
    %v1834 = vpack.c.bf16 %v1830, %v1830
    %v1835 = vpack.c.bf16 %v1831, %v1831
    %v1836 = vpack.c.bf16 %v1832, %v1832
    %s1837 = scalar_lea.vmem [#allocation5], 1024
    %v1838 = vld [vmem:[%s1837] sm:$0xff]
    %v1839 = vld [vmem:[%s1837 + $0x8] sm:$0xff]
    %v1840 = vld [vmem:[%s1837 + $0x10] sm:$0xff]
    %v1841 = vld [vmem:[%s1837 + $0x18] sm:$0xff]
    %v1842 = vld [vmem:[%s1837 + $0x20] sm:$0xff]
    %v1843 = vld [vmem:[%s1837 + $0x28] sm:$0xff]
    %v1844 = vld [vmem:[%s1837 + $0x30] sm:$0xff]
    %v1845 = vld [vmem:[%s1837 + $0x38] sm:$0xff]
    %v1846 = vld [vmem:[%s1837 + $0x40] sm:$0xff]
    %v1847 = vld [vmem:[%s1837 + $0x48] sm:$0xff]
    %v1848 = vld [vmem:[%s1837 + $0x50] sm:$0xff]
    %v1849 = vld [vmem:[%s1837 + $0x58] sm:$0xff]
    %v1850 = vld [vmem:[%s1837 + $0x60] sm:$0xff]
    %v1851 = vld [vmem:[%s1837 + $0x68] sm:$0xff]
    %v1852 = vld [vmem:[%s1837 + $0x70] sm:$0xff]
    %v1853 = vld [vmem:[%s1837 + $0x78] sm:$0xff]
    %v1854 = vld [vmem:[%s1837 + $0x80] sm:$0xff]
    %v1855 = vld [vmem:[%s1837 + $0x88] sm:$0xff]
    %v1856 = vld [vmem:[%s1837 + $0x90] sm:$0xff]
    %v1857 = vld [vmem:[%s1837 + $0x98] sm:$0xff]
    %v1858 = vld [vmem:[%s1837 + $0xa0] sm:$0xff]
    %v1859 = vld [vmem:[%s1837 + $0xa8] sm:$0xff]
    %v1860 = vld [vmem:[%s1837 + $0xb0] sm:$0xff]
    %v1861 = vld [vmem:[%s1837 + $0xb8] sm:$0xff]
    %v1862 = vld [vmem:[%s1837 + $0xc0] sm:$0xff]
    %v1863 = vld [vmem:[%s1837 + $0xc8] sm:$0xff]
    %v1864 = vld [vmem:[%s1837 + $0xd0] sm:$0xff]
    %v1865 = vld [vmem:[%s1837 + $0xd8] sm:$0xff]
    %v1866 = vld [vmem:[%s1837 + $0xe0] sm:$0xff]
    %v1867 = vld [vmem:[%s1837 + $0xe8] sm:$0xff]
    %v1868 = vld [vmem:[%s1837 + $0xf0] sm:$0xff]
    %v1869 = vld [vmem:[%s1837 + $0xf8] sm:$0xff]
    %v1870 = vld [vmem:[%s1837 + $0x100] sm:$0xff]
    %v1871 = vld [vmem:[%s1837 + $0x108] sm:$0xff]
    %v1872 = vld [vmem:[%s1837 + $0x110] sm:$0xff]
    %v1873 = vld [vmem:[%s1837 + $0x118] sm:$0xff]
    %v1874 = vld [vmem:[%s1837 + $0x120] sm:$0xff]
    %v1875 = vld [vmem:[%s1837 + $0x128] sm:$0xff]
    %v1876 = vld [vmem:[%s1837 + $0x130] sm:$0xff]
    %v1877 = vld [vmem:[%s1837 + $0x138] sm:$0xff]
    %v1878 = vld [vmem:[%s1837 + $0x140] sm:$0xff]
    %v1879 = vld [vmem:[%s1837 + $0x148] sm:$0xff]
    %v1880 = vld [vmem:[%s1837 + $0x150] sm:$0xff]
    %v1881 = vld [vmem:[%s1837 + $0x158] sm:$0xff]
    %v1882 = vld [vmem:[%s1837 + $0x160] sm:$0xff]
    %v1883 = vld [vmem:[%s1837 + $0x168] sm:$0xff]
    %v1884 = vld [vmem:[%s1837 + $0x170] sm:$0xff]
    %v1885 = vld [vmem:[%s1837 + $0x178] sm:$0xff]
    %v1886 = vld [vmem:[%s1837 + $0x180] sm:$0xff]
    %v1887 = vld [vmem:[%s1837 + $0x188] sm:$0xff]
    %v1888 = vld [vmem:[%s1837 + $0x190] sm:$0xff]
    %v1889 = vld [vmem:[%s1837 + $0x198] sm:$0xff]
    %v1890 = vld [vmem:[%s1837 + $0x1a0] sm:$0xff]
    %v1891 = vld [vmem:[%s1837 + $0x1a8] sm:$0xff]
    %v1892 = vld [vmem:[%s1837 + $0x1b0] sm:$0xff]
    %v1893 = vld [vmem:[%s1837 + $0x1b8] sm:$0xff]
    %v1894 = vld [vmem:[%s1837 + $0x1c0] sm:$0xff]
    %v1895 = vld [vmem:[%s1837 + $0x1c8] sm:$0xff]
    %v1896 = vld [vmem:[%s1837 + $0x1d0] sm:$0xff]
    %v1897 = vld [vmem:[%s1837 + $0x1d8] sm:$0xff]
    %v1898 = vld [vmem:[%s1837 + $0x1e0] sm:$0xff]
    %v1899 = vld [vmem:[%s1837 + $0x1e8] sm:$0xff]
    %v1900 = vld [vmem:[%s1837 + $0x1f0] sm:$0xff]
    %v1901 = vld [vmem:[%s1837 + $0x1f8] sm:$0xff]
    %v1902 = vld [vmem:[%s1837 + $0x200] sm:$0xff]
    %v1903 = vld [vmem:[%s1837 + $0x208] sm:$0xff]
    %v1904 = vld [vmem:[%s1837 + $0x210] sm:$0xff]
    %v1905 = vld [vmem:[%s1837 + $0x218] sm:$0xff]
    %v1906 = vld [vmem:[%s1837 + $0x220] sm:$0xff]
    %v1907 = vld [vmem:[%s1837 + $0x228] sm:$0xff]
    %v1908 = vld [vmem:[%s1837 + $0x230] sm:$0xff]
    %v1909 = vld [vmem:[%s1837 + $0x238] sm:$0xff]
    %v1910 = vld [vmem:[%s1837 + $0x240] sm:$0xff]
    %v1911 = vld [vmem:[%s1837 + $0x248] sm:$0xff]
    %v1912 = vld [vmem:[%s1837 + $0x250] sm:$0xff]
    %v1913 = vld [vmem:[%s1837 + $0x258] sm:$0xff]
    %v1914 = vld [vmem:[%s1837 + $0x260] sm:$0xff]
    %v1915 = vld [vmem:[%s1837 + $0x268] sm:$0xff]
    %v1916 = vld [vmem:[%s1837 + $0x270] sm:$0xff]
    %v1917 = vld [vmem:[%s1837 + $0x278] sm:$0xff]
    %v1918 = vld [vmem:[%s1837 + $0x280] sm:$0xff]
    %v1919 = vld [vmem:[%s1837 + $0x288] sm:$0xff]
    %v1920 = vld [vmem:[%s1837 + $0x290] sm:$0xff]
    %v1921 = vld [vmem:[%s1837 + $0x298] sm:$0xff]
    %v1922 = vld [vmem:[%s1837 + $0x2a0] sm:$0xff]
    %v1923 = vld [vmem:[%s1837 + $0x2a8] sm:$0xff]
    %v1924 = vld [vmem:[%s1837 + $0x2b0] sm:$0xff]
    %v1925 = vld [vmem:[%s1837 + $0x2b8] sm:$0xff]
    %v1926 = vld [vmem:[%s1837 + $0x2c0] sm:$0xff]
    %v1927 = vld [vmem:[%s1837 + $0x2c8] sm:$0xff]
    %v1928 = vld [vmem:[%s1837 + $0x2d0] sm:$0xff]
    %v1929 = vld [vmem:[%s1837 + $0x2d8] sm:$0xff]
    %v1930 = vld [vmem:[%s1837 + $0x2e0] sm:$0xff]
    %v1931 = vld [vmem:[%s1837 + $0x2e8] sm:$0xff]
    %v1932 = vld [vmem:[%s1837 + $0x2f0] sm:$0xff]
    %v1933 = vld [vmem:[%s1837 + $0x2f8] sm:$0xff]
    %v1934 = vld [vmem:[%s1837 + $0x300] sm:$0xff]
    %v1935 = vld [vmem:[%s1837 + $0x308] sm:$0xff]
    %v1936 = vld [vmem:[%s1837 + $0x310] sm:$0xff]
    %v1937 = vld [vmem:[%s1837 + $0x318] sm:$0xff]
    %v1938 = vld [vmem:[%s1837 + $0x320] sm:$0xff]
    %v1939 = vld [vmem:[%s1837 + $0x328] sm:$0xff]
    %v1940 = vld [vmem:[%s1837 + $0x330] sm:$0xff]
    %v1941 = vld [vmem:[%s1837 + $0x338] sm:$0xff]
    %v1942 = vld [vmem:[%s1837 + $0x340] sm:$0xff]
    %v1943 = vld [vmem:[%s1837 + $0x348] sm:$0xff]
    %v1944 = vld [vmem:[%s1837 + $0x350] sm:$0xff]
    %v1945 = vld [vmem:[%s1837 + $0x358] sm:$0xff]
    %v1946 = vld [vmem:[%s1837 + $0x360] sm:$0xff]
    %v1947 = vld [vmem:[%s1837 + $0x368] sm:$0xff]
    %v1948 = vld [vmem:[%s1837 + $0x370] sm:$0xff]
    %v1949 = vld [vmem:[%s1837 + $0x378] sm:$0xff]
    %v1950 = vld [vmem:[%s1837 + $0x380] sm:$0xff]
    %v1951 = vld [vmem:[%s1837 + $0x388] sm:$0xff]
    %v1952 = vld [vmem:[%s1837 + $0x390] sm:$0xff]
    %v1953 = vld [vmem:[%s1837 + $0x398] sm:$0xff]
    %v1954 = vld [vmem:[%s1837 + $0x3a0] sm:$0xff]
    %v1955 = vld [vmem:[%s1837 + $0x3a8] sm:$0xff]
    %v1956 = vld [vmem:[%s1837 + $0x3b0] sm:$0xff]
    %v1957 = vld [vmem:[%s1837 + $0x3b8] sm:$0xff]
    %v1958 = vld [vmem:[%s1837 + $0x3c0] sm:$0xff]
    %v1959 = vld [vmem:[%s1837 + $0x3c8] sm:$0xff]
    %v1960 = vld [vmem:[%s1837 + $0x3d0] sm:$0xff]
    %v1961 = vld [vmem:[%s1837 + $0x3d8] sm:$0xff]
    %v1962 = vld [vmem:[%s1837 + $0x3e0] sm:$0xff]
    %v1963 = vld [vmem:[%s1837 + $0x3e8] sm:$0xff]
    %v1964 = vld [vmem:[%s1837 + $0x3f0] sm:$0xff]
    %v1965 = vld [vmem:[%s1837 + $0x3f8] sm:$0xff]
    %s1966 = scalar_lea.vmem %s4, 4
    %v1967 = vld [vmem:[%s1966] sm:$0xf]
    %v1968 = vunpack.c.l.bf16 %v1967
    %v1970 = vlaneseq
    %v1971 = vshrl.u32 %v1970, 7
    %v1972 = vsub.s32 0, %v1971
    %v1973 = vrot.slane %v1968, %v1972
    %v1974 = vlaneseq
    %v1975 = vshrl.u32 %v1974, 7
    %v1976 = vsub.s32 2, %v1975
    %v1977 = vrot.slane %v1968, %v1976
    %v1978 = vlaneseq
    %v1979 = vshrl.u32 %v1978, 7
    %v1980 = vsub.s32 4, %v1979
    %v1981 = vrot.slane %v1968, %v1980
    %v1982 = vlaneseq
    %v1983 = vshrl.u32 %v1982, 7
    %v1984 = vsub.s32 6, %v1983
    %v1985 = vrot.slane %v1968, %v1984
    %v1990 = vlaneseq
    %v1991 = vshrl.u32 %v1990, 7
    %v1992 = vsub.s32 0, %v1991
    %v1993 = vrot.slane %v1973, %v1992
    %v1994 = vlaneseq
    %v1995 = vshrl.u32 %v1994, 7
    %v1996 = vsub.s32 0, %v1995
    %v1997 = vrot.slane %v1977, %v1996
    %v1998 = vlaneseq
    %v1999 = vshrl.u32 %v1998, 7
    %v2000 = vsub.s32 0, %v1999
    %v2001 = vrot.slane %v1981, %v2000
    %v2002 = vlaneseq
    %v2003 = vshrl.u32 %v2002, 7
    %v2004 = vsub.s32 0, %v2003
    %v2005 = vrot.slane %v1985, %v2004
    %v2134 = vunpack.c.l.b16 %v1838
    %v2135 = vunpack.c.h.b16 %v1838
    %v2136 = vunpack.c.l.b16 %v1839
    %v2137 = vunpack.c.h.b16 %v1839
    %v2138 = vunpack.c.l.b16 %v1840
    %v2139 = vunpack.c.h.b16 %v1840
    %v2140 = vunpack.c.l.b16 %v1841
    %v2141 = vunpack.c.h.b16 %v1841
    %v2142 = vunpack.c.l.b16 %v1842
    %v2143 = vunpack.c.h.b16 %v1842
    %v2144 = vunpack.c.l.b16 %v1843
    %v2145 = vunpack.c.h.b16 %v1843
    %v2146 = vunpack.c.l.b16 %v1844
    %v2147 = vunpack.c.h.b16 %v1844
    %v2148 = vunpack.c.l.b16 %v1845
    %v2149 = vunpack.c.h.b16 %v1845
    %v2150 = vunpack.c.l.b16 %v1846
    %v2151 = vunpack.c.h.b16 %v1846
    %v2152 = vunpack.c.l.b16 %v1847
    %v2153 = vunpack.c.h.b16 %v1847
    %v2154 = vunpack.c.l.b16 %v1848
    %v2155 = vunpack.c.h.b16 %v1848
    %v2156 = vunpack.c.l.b16 %v1849
    %v2157 = vunpack.c.h.b16 %v1849
    %v2158 = vunpack.c.l.b16 %v1850
    %v2159 = vunpack.c.h.b16 %v1850
    %v2160 = vunpack.c.l.b16 %v1851
    %v2161 = vunpack.c.h.b16 %v1851
    %v2162 = vunpack.c.l.b16 %v1852
    %v2163 = vunpack.c.h.b16 %v1852
    %v2164 = vunpack.c.l.b16 %v1853
    %v2165 = vunpack.c.h.b16 %v1853
    %v2166 = vunpack.c.l.b16 %v1854
    %v2167 = vunpack.c.h.b16 %v1854
    %v2168 = vunpack.c.l.b16 %v1855
    %v2169 = vunpack.c.h.b16 %v1855
    %v2170 = vunpack.c.l.b16 %v1856
    %v2171 = vunpack.c.h.b16 %v1856
    %v2172 = vunpack.c.l.b16 %v1857
    %v2173 = vunpack.c.h.b16 %v1857
    %v2174 = vunpack.c.l.b16 %v1858
    %v2175 = vunpack.c.h.b16 %v1858
    %v2176 = vunpack.c.l.b16 %v1859
    %v2177 = vunpack.c.h.b16 %v1859
    %v2178 = vunpack.c.l.b16 %v1860
    %v2179 = vunpack.c.h.b16 %v1860
    %v2180 = vunpack.c.l.b16 %v1861
    %v2181 = vunpack.c.h.b16 %v1861
    %v2182 = vunpack.c.l.b16 %v1862
    %v2183 = vunpack.c.h.b16 %v1862
    %v2184 = vunpack.c.l.b16 %v1863
    %v2185 = vunpack.c.h.b16 %v1863
    %v2186 = vunpack.c.l.b16 %v1864
    %v2187 = vunpack.c.h.b16 %v1864
    %v2188 = vunpack.c.l.b16 %v1865
    %v2189 = vunpack.c.h.b16 %v1865
    %v2190 = vunpack.c.l.b16 %v1866
    %v2191 = vunpack.c.h.b16 %v1866
    %v2192 = vunpack.c.l.b16 %v1867
    %v2193 = vunpack.c.h.b16 %v1867
    %v2194 = vunpack.c.l.b16 %v1868
    %v2195 = vunpack.c.h.b16 %v1868
    %v2196 = vunpack.c.l.b16 %v1869
    %v2197 = vunpack.c.h.b16 %v1869
    %v2198 = vunpack.c.l.b16 %v1870
    %v2199 = vunpack.c.h.b16 %v1870
    %v2200 = vunpack.c.l.b16 %v1871
    %v2201 = vunpack.c.h.b16 %v1871
    %v2202 = vunpack.c.l.b16 %v1872
    %v2203 = vunpack.c.h.b16 %v1872
    %v2204 = vunpack.c.l.b16 %v1873
    %v2205 = vunpack.c.h.b16 %v1873
    %v2206 = vunpack.c.l.b16 %v1874
    %v2207 = vunpack.c.h.b16 %v1874
    %v2208 = vunpack.c.l.b16 %v1875
    %v2209 = vunpack.c.h.b16 %v1875
    %v2210 = vunpack.c.l.b16 %v1876
    %v2211 = vunpack.c.h.b16 %v1876
    %v2212 = vunpack.c.l.b16 %v1877
    %v2213 = vunpack.c.h.b16 %v1877
    %v2214 = vunpack.c.l.b16 %v1878
    %v2215 = vunpack.c.h.b16 %v1878
    %v2216 = vunpack.c.l.b16 %v1879
    %v2217 = vunpack.c.h.b16 %v1879
    %v2218 = vunpack.c.l.b16 %v1880
    %v2219 = vunpack.c.h.b16 %v1880
    %v2220 = vunpack.c.l.b16 %v1881
    %v2221 = vunpack.c.h.b16 %v1881
    %v2222 = vunpack.c.l.b16 %v1882
    %v2223 = vunpack.c.h.b16 %v1882
    %v2224 = vunpack.c.l.b16 %v1883
    %v2225 = vunpack.c.h.b16 %v1883
    %v2226 = vunpack.c.l.b16 %v1884
    %v2227 = vunpack.c.h.b16 %v1884
    %v2228 = vunpack.c.l.b16 %v1885
    %v2229 = vunpack.c.h.b16 %v1885
    %v2230 = vunpack.c.l.b16 %v1886
    %v2231 = vunpack.c.h.b16 %v1886
    %v2232 = vunpack.c.l.b16 %v1887
    %v2233 = vunpack.c.h.b16 %v1887
    %v2234 = vunpack.c.l.b16 %v1888
    %v2235 = vunpack.c.h.b16 %v1888
    %v2236 = vunpack.c.l.b16 %v1889
    %v2237 = vunpack.c.h.b16 %v1889
    %v2238 = vunpack.c.l.b16 %v1890
    %v2239 = vunpack.c.h.b16 %v1890
    %v2240 = vunpack.c.l.b16 %v1891
    %v2241 = vunpack.c.h.b16 %v1891
    %v2242 = vunpack.c.l.b16 %v1892
    %v2243 = vunpack.c.h.b16 %v1892
    %v2244 = vunpack.c.l.b16 %v1893
    %v2245 = vunpack.c.h.b16 %v1893
    %v2246 = vunpack.c.l.b16 %v1894
    %v2247 = vunpack.c.h.b16 %v1894
    %v2248 = vunpack.c.l.b16 %v1895
    %v2249 = vunpack.c.h.b16 %v1895
    %v2250 = vunpack.c.l.b16 %v1896
    %v2251 = vunpack.c.h.b16 %v1896
    %v2252 = vunpack.c.l.b16 %v1897
    %v2253 = vunpack.c.h.b16 %v1897
    %v2254 = vunpack.c.l.b16 %v1898
    %v2255 = vunpack.c.h.b16 %v1898
    %v2256 = vunpack.c.l.b16 %v1899
    %v2257 = vunpack.c.h.b16 %v1899
    %v2258 = vunpack.c.l.b16 %v1900
    %v2259 = vunpack.c.h.b16 %v1900
    %v2260 = vunpack.c.l.b16 %v1901
    %v2261 = vunpack.c.h.b16 %v1901
    %v2262 = vunpack.c.l.b16 %v1902
    %v2263 = vunpack.c.h.b16 %v1902
    %v2264 = vunpack.c.l.b16 %v1903
    %v2265 = vunpack.c.h.b16 %v1903
    %v2266 = vunpack.c.l.b16 %v1904
    %v2267 = vunpack.c.h.b16 %v1904
    %v2268 = vunpack.c.l.b16 %v1905
    %v2269 = vunpack.c.h.b16 %v1905
    %v2270 = vunpack.c.l.b16 %v1906
    %v2271 = vunpack.c.h.b16 %v1906
    %v2272 = vunpack.c.l.b16 %v1907
    %v2273 = vunpack.c.h.b16 %v1907
    %v2274 = vunpack.c.l.b16 %v1908
    %v2275 = vunpack.c.h.b16 %v1908
    %v2276 = vunpack.c.l.b16 %v1909
    %v2277 = vunpack.c.h.b16 %v1909
    %v2278 = vunpack.c.l.b16 %v1910
    %v2279 = vunpack.c.h.b16 %v1910
    %v2280 = vunpack.c.l.b16 %v1911
    %v2281 = vunpack.c.h.b16 %v1911
    %v2282 = vunpack.c.l.b16 %v1912
    %v2283 = vunpack.c.h.b16 %v1912
    %v2284 = vunpack.c.l.b16 %v1913
    %v2285 = vunpack.c.h.b16 %v1913
    %v2286 = vunpack.c.l.b16 %v1914
    %v2287 = vunpack.c.h.b16 %v1914
    %v2288 = vunpack.c.l.b16 %v1915
    %v2289 = vunpack.c.h.b16 %v1915
    %v2290 = vunpack.c.l.b16 %v1916
    %v2291 = vunpack.c.h.b16 %v1916
    %v2292 = vunpack.c.l.b16 %v1917
    %v2293 = vunpack.c.h.b16 %v1917
    %v2294 = vunpack.c.l.b16 %v1918
    %v2295 = vunpack.c.h.b16 %v1918
    %v2296 = vunpack.c.l.b16 %v1919
    %v2297 = vunpack.c.h.b16 %v1919
    %v2298 = vunpack.c.l.b16 %v1920
    %v2299 = vunpack.c.h.b16 %v1920
    %v2300 = vunpack.c.l.b16 %v1921
    %v2301 = vunpack.c.h.b16 %v1921
    %v2302 = vunpack.c.l.b16 %v1922
    %v2303 = vunpack.c.h.b16 %v1922
    %v2304 = vunpack.c.l.b16 %v1923
    %v2305 = vunpack.c.h.b16 %v1923
    %v2306 = vunpack.c.l.b16 %v1924
    %v2307 = vunpack.c.h.b16 %v1924
    %v2308 = vunpack.c.l.b16 %v1925
    %v2309 = vunpack.c.h.b16 %v1925
    %v2310 = vunpack.c.l.b16 %v1926
    %v2311 = vunpack.c.h.b16 %v1926
    %v2312 = vunpack.c.l.b16 %v1927
    %v2313 = vunpack.c.h.b16 %v1927
    %v2314 = vunpack.c.l.b16 %v1928
    %v2315 = vunpack.c.h.b16 %v1928
    %v2316 = vunpack.c.l.b16 %v1929
    %v2317 = vunpack.c.h.b16 %v1929
    %v2318 = vunpack.c.l.b16 %v1930
    %v2319 = vunpack.c.h.b16 %v1930
    %v2320 = vunpack.c.l.b16 %v1931
    %v2321 = vunpack.c.h.b16 %v1931
    %v2322 = vunpack.c.l.b16 %v1932
    %v2323 = vunpack.c.h.b16 %v1932
    %v2324 = vunpack.c.l.b16 %v1933
    %v2325 = vunpack.c.h.b16 %v1933
    %v2326 = vunpack.c.l.b16 %v1934
    %v2327 = vunpack.c.h.b16 %v1934
    %v2328 = vunpack.c.l.b16 %v1935
    %v2329 = vunpack.c.h.b16 %v1935
    %v2330 = vunpack.c.l.b16 %v1936
    %v2331 = vunpack.c.h.b16 %v1936
    %v2332 = vunpack.c.l.b16 %v1937
    %v2333 = vunpack.c.h.b16 %v1937
    %v2334 = vunpack.c.l.b16 %v1938
    %v2335 = vunpack.c.h.b16 %v1938
    %v2336 = vunpack.c.l.b16 %v1939
    %v2337 = vunpack.c.h.b16 %v1939
    %v2338 = vunpack.c.l.b16 %v1940
    %v2339 = vunpack.c.h.b16 %v1940
    %v2340 = vunpack.c.l.b16 %v1941
    %v2341 = vunpack.c.h.b16 %v1941
    %v2342 = vunpack.c.l.b16 %v1942
    %v2343 = vunpack.c.h.b16 %v1942
    %v2344 = vunpack.c.l.b16 %v1943
    %v2345 = vunpack.c.h.b16 %v1943
    %v2346 = vunpack.c.l.b16 %v1944
    %v2347 = vunpack.c.h.b16 %v1944
    %v2348 = vunpack.c.l.b16 %v1945
    %v2349 = vunpack.c.h.b16 %v1945
    %v2350 = vunpack.c.l.b16 %v1946
    %v2351 = vunpack.c.h.b16 %v1946
    %v2352 = vunpack.c.l.b16 %v1947
    %v2353 = vunpack.c.h.b16 %v1947
    %v2354 = vunpack.c.l.b16 %v1948
    %v2355 = vunpack.c.h.b16 %v1948
    %v2356 = vunpack.c.l.b16 %v1949
    %v2357 = vunpack.c.h.b16 %v1949
    %v2358 = vunpack.c.l.b16 %v1950
    %v2359 = vunpack.c.h.b16 %v1950
    %v2360 = vunpack.c.l.b16 %v1951
    %v2361 = vunpack.c.h.b16 %v1951
    %v2362 = vunpack.c.l.b16 %v1952
    %v2363 = vunpack.c.h.b16 %v1952
    %v2364 = vunpack.c.l.b16 %v1953
    %v2365 = vunpack.c.h.b16 %v1953
    %v2366 = vunpack.c.l.b16 %v1954
    %v2367 = vunpack.c.h.b16 %v1954
    %v2368 = vunpack.c.l.b16 %v1955
    %v2369 = vunpack.c.h.b16 %v1955
    %v2370 = vunpack.c.l.b16 %v1956
    %v2371 = vunpack.c.h.b16 %v1956
    %v2372 = vunpack.c.l.b16 %v1957
    %v2373 = vunpack.c.h.b16 %v1957
    %v2374 = vunpack.c.l.b16 %v1958
    %v2375 = vunpack.c.h.b16 %v1958
    %v2376 = vunpack.c.l.b16 %v1959
    %v2377 = vunpack.c.h.b16 %v1959
    %v2378 = vunpack.c.l.b16 %v1960
    %v2379 = vunpack.c.h.b16 %v1960
    %v2380 = vunpack.c.l.b16 %v1961
    %v2381 = vunpack.c.h.b16 %v1961
    %v2382 = vunpack.c.l.b16 %v1962
    %v2383 = vunpack.c.h.b16 %v1962
    %v2384 = vunpack.c.l.b16 %v1963
    %v2385 = vunpack.c.h.b16 %v1963
    %v2386 = vunpack.c.l.b16 %v1964
    %v2387 = vunpack.c.h.b16 %v1964
    %v2388 = vunpack.c.l.b16 %v1965
    %v2389 = vunpack.c.h.b16 %v1965
    %v2390 = vpack.c.b16 %v2138, %v2134
    %v2391 = vpack.c.b16 %v2139, %v2135
    %v2392 = vpack.c.b16 %v2140, %v2136
    %v2393 = vpack.c.b16 %v2141, %v2137
    %v2394 = vpack.c.b16 %v2146, %v2142
    %v2395 = vpack.c.b16 %v2147, %v2143
    %v2396 = vpack.c.b16 %v2148, %v2144
    %v2397 = vpack.c.b16 %v2149, %v2145
    %v2398 = vpack.c.b16 %v2154, %v2150
    %v2399 = vpack.c.b16 %v2155, %v2151
    %v2400 = vpack.c.b16 %v2156, %v2152
    %v2401 = vpack.c.b16 %v2157, %v2153
    %v2402 = vpack.c.b16 %v2162, %v2158
    %v2403 = vpack.c.b16 %v2163, %v2159
    %v2404 = vpack.c.b16 %v2164, %v2160
    %v2405 = vpack.c.b16 %v2165, %v2161
    %v2406 = vpack.c.b16 %v2170, %v2166
    %v2407 = vpack.c.b16 %v2171, %v2167
    %v2408 = vpack.c.b16 %v2172, %v2168
    %v2409 = vpack.c.b16 %v2173, %v2169
    %v2410 = vpack.c.b16 %v2178, %v2174
    %v2411 = vpack.c.b16 %v2179, %v2175
    %v2412 = vpack.c.b16 %v2180, %v2176
    %v2413 = vpack.c.b16 %v2181, %v2177
    %v2414 = vpack.c.b16 %v2186, %v2182
    %v2415 = vpack.c.b16 %v2187, %v2183
    %v2416 = vpack.c.b16 %v2188, %v2184
    %v2417 = vpack.c.b16 %v2189, %v2185
    %v2418 = vpack.c.b16 %v2194, %v2190
    %v2419 = vpack.c.b16 %v2195, %v2191
    %v2420 = vpack.c.b16 %v2196, %v2192
    %v2421 = vpack.c.b16 %v2197, %v2193
    %v2422 = vpack.c.b16 %v2202, %v2198
    %v2423 = vpack.c.b16 %v2203, %v2199
    %v2424 = vpack.c.b16 %v2204, %v2200
    %v2425 = vpack.c.b16 %v2205, %v2201
    %v2426 = vpack.c.b16 %v2210, %v2206
    %v2427 = vpack.c.b16 %v2211, %v2207
    %v2428 = vpack.c.b16 %v2212, %v2208
    %v2429 = vpack.c.b16 %v2213, %v2209
    %v2430 = vpack.c.b16 %v2218, %v2214
    %v2431 = vpack.c.b16 %v2219, %v2215
    %v2432 = vpack.c.b16 %v2220, %v2216
    %v2433 = vpack.c.b16 %v2221, %v2217
    %v2434 = vpack.c.b16 %v2226, %v2222
    %v2435 = vpack.c.b16 %v2227, %v2223
    %v2436 = vpack.c.b16 %v2228, %v2224
    %v2437 = vpack.c.b16 %v2229, %v2225
    %v2438 = vpack.c.b16 %v2234, %v2230
    %v2439 = vpack.c.b16 %v2235, %v2231
    %v2440 = vpack.c.b16 %v2236, %v2232
    %v2441 = vpack.c.b16 %v2237, %v2233
    %v2442 = vpack.c.b16 %v2242, %v2238
    %v2443 = vpack.c.b16 %v2243, %v2239
    %v2444 = vpack.c.b16 %v2244, %v2240
    %v2445 = vpack.c.b16 %v2245, %v2241
    %v2446 = vpack.c.b16 %v2250, %v2246
    %v2447 = vpack.c.b16 %v2251, %v2247
    %v2448 = vpack.c.b16 %v2252, %v2248
    %v2449 = vpack.c.b16 %v2253, %v2249
    %v2450 = vpack.c.b16 %v2258, %v2254
    %v2451 = vpack.c.b16 %v2259, %v2255
    %v2452 = vpack.c.b16 %v2260, %v2256
    %v2453 = vpack.c.b16 %v2261, %v2257
    %v2454 = vpack.c.b16 %v2266, %v2262
    %v2455 = vpack.c.b16 %v2267, %v2263
    %v2456 = vpack.c.b16 %v2268, %v2264
    %v2457 = vpack.c.b16 %v2269, %v2265
    %v2458 = vpack.c.b16 %v2274, %v2270
    %v2459 = vpack.c.b16 %v2275, %v2271
    %v2460 = vpack.c.b16 %v2276, %v2272
    %v2461 = vpack.c.b16 %v2277, %v2273
    %v2462 = vpack.c.b16 %v2282, %v2278
    %v2463 = vpack.c.b16 %v2283, %v2279
    %v2464 = vpack.c.b16 %v2284, %v2280
    %v2465 = vpack.c.b16 %v2285, %v2281
    %v2466 = vpack.c.b16 %v2290, %v2286
    %v2467 = vpack.c.b16 %v2291, %v2287
    %v2468 = vpack.c.b16 %v2292, %v2288
    %v2469 = vpack.c.b16 %v2293, %v2289
    %v2470 = vpack.c.b16 %v2298, %v2294
    %v2471 = vpack.c.b16 %v2299, %v2295
    %v2472 = vpack.c.b16 %v2300, %v2296
    %v2473 = vpack.c.b16 %v2301, %v2297
    %v2474 = vpack.c.b16 %v2306, %v2302
    %v2475 = vpack.c.b16 %v2307, %v2303
    %v2476 = vpack.c.b16 %v2308, %v2304
    %v2477 = vpack.c.b16 %v2309, %v2305
    %v2478 = vpack.c.b16 %v2314, %v2310
    %v2479 = vpack.c.b16 %v2315, %v2311
    %v2480 = vpack.c.b16 %v2316, %v2312
    %v2481 = vpack.c.b16 %v2317, %v2313
    %v2482 = vpack.c.b16 %v2322, %v2318
    %v2483 = vpack.c.b16 %v2323, %v2319
    %v2484 = vpack.c.b16 %v2324, %v2320
    %v2485 = vpack.c.b16 %v2325, %v2321
    %v2486 = vpack.c.b16 %v2330, %v2326
    %v2487 = vpack.c.b16 %v2331, %v2327
    %v2488 = vpack.c.b16 %v2332, %v2328
    %v2489 = vpack.c.b16 %v2333, %v2329
    %v2490 = vpack.c.b16 %v2338, %v2334
    %v2491 = vpack.c.b16 %v2339, %v2335
    %v2492 = vpack.c.b16 %v2340, %v2336
    %v2493 = vpack.c.b16 %v2341, %v2337
    %v2494 = vpack.c.b16 %v2346, %v2342
    %v2495 = vpack.c.b16 %v2347, %v2343
    %v2496 = vpack.c.b16 %v2348, %v2344
    %v2497 = vpack.c.b16 %v2349, %v2345
    %v2498 = vpack.c.b16 %v2354, %v2350
    %v2499 = vpack.c.b16 %v2355, %v2351
    %v2500 = vpack.c.b16 %v2356, %v2352
    %v2501 = vpack.c.b16 %v2357, %v2353
    %v2502 = vpack.c.b16 %v2362, %v2358
    %v2503 = vpack.c.b16 %v2363, %v2359
    %v2504 = vpack.c.b16 %v2364, %v2360
    %v2505 = vpack.c.b16 %v2365, %v2361
    %v2506 = vpack.c.b16 %v2370, %v2366
    %v2507 = vpack.c.b16 %v2371, %v2367
    %v2508 = vpack.c.b16 %v2372, %v2368
    %v2509 = vpack.c.b16 %v2373, %v2369
    %v2510 = vpack.c.b16 %v2378, %v2374
    %v2511 = vpack.c.b16 %v2379, %v2375
    %v2512 = vpack.c.b16 %v2380, %v2376
    %v2513 = vpack.c.b16 %v2381, %v2377
    %v2514 = vpack.c.b16 %v2386, %v2382
    %v2515 = vpack.c.b16 %v2387, %v2383
    %v2516 = vpack.c.b16 %v2388, %v2384
    %v2517 = vpack.c.b16 %v2389, %v2385
    %2646 = vmatprep.subr.bf16.mxu0 %v2419
    %2647 = vmatpush1.bf16.msra.mxu0 %v2418
    %2648 = vmatprep.subr.bf16.mxu0 %v2415
    %2649 = vmatpush1.bf16.msra.mxu0 %v2414
    %2650 = vmatprep.subr.bf16.mxu0 %v2411
    %2651 = vmatpush1.bf16.msra.mxu0 %v2410
    %2652 = vmatprep.subr.bf16.mxu0 %v2407
    %2653 = vmatpush1.bf16.msra.mxu0 %v2406
    %2654 = vmatprep.subr.bf16.mxu0 %v2403
    %2655 = vmatpush1.bf16.msra.mxu0 %v2402
    %2656 = vmatprep.subr.bf16.mxu0 %v2399
    %2657 = vmatpush1.bf16.msra.mxu0 %v2398
    %2658 = vmatprep.subr.bf16.mxu0 %v2395
    %2659 = vmatpush1.bf16.msra.mxu0 %v2394
    %2660 = vmatprep.subr.bf16.mxu0 %v2391
    %2661 = vmatpush1.bf16.msra.mxu0 %v2390
    %2662 = vmatprep.subr.bf16.mxu0 %v2451
    %2663 = vmatpush2.bf16.msra.mxu0 %v2450
    %2664 = vmatprep.subr.bf16.mxu0 %v2447
    %2665 = vmatpush2.bf16.msra.mxu0 %v2446
    %2666 = vmatprep.subr.bf16.mxu0 %v2443
    %2667 = vmatpush2.bf16.msra.mxu0 %v2442
    %2668 = vmatprep.subr.bf16.mxu0 %v2439
    %2669 = vmatpush2.bf16.msra.mxu0 %v2438
    %2670 = vmatprep.subr.bf16.mxu0 %v2435
    %2671 = vmatpush2.bf16.msra.mxu0 %v2434
    %2672 = vmatprep.subr.bf16.mxu0 %v2431
    %2673 = vmatpush2.bf16.msra.mxu0 %v2430
    %2674 = vmatprep.subr.bf16.mxu0 %v2427
    %2675 = vmatpush2.bf16.msra.mxu0 %v2426
    %2676 = vmatprep.subr.bf16.mxu0 %v2423
    %2677 = vmatpush2.bf16.msra.mxu0 %v2422
    %2678 = vmatprep.mubr.bf16.mxu0 %v1834
    %2679 = vmatmul.mubr.bf16.gmra.mxu0 %v1833
    %v2680 = vpop.f32.mrf.mxu0
    %v2681 = vadd.f32 %v1993, %v2680
    %v2682 = vpop.f32.mrf.mxu0
    %v2683 = vadd.f32 %v1997, %v2682
    %v2684 = vpop.f32.mrf.mxu0
    %v2685 = vpop.f32.mrf.mxu0
    %2686 = vdwg.mxu0
    %2687 = vmatprep.subr.bf16.mxu0 %v2483
    %2688 = vmatpush1.bf16.msra.mxu0 %v2482
    %2689 = vmatprep.subr.bf16.mxu0 %v2479
    %2690 = vmatpush1.bf16.msra.mxu0 %v2478
    %2691 = vmatprep.subr.bf16.mxu0 %v2475
    %2692 = vmatpush1.bf16.msra.mxu0 %v2474
    %2693 = vmatprep.subr.bf16.mxu0 %v2471
    %2694 = vmatpush1.bf16.msra.mxu0 %v2470
    %2695 = vmatprep.subr.bf16.mxu0 %v2467
    %2696 = vmatpush1.bf16.msra.mxu0 %v2466
    %2697 = vmatprep.subr.bf16.mxu0 %v2463
    %2698 = vmatpush1.bf16.msra.mxu0 %v2462
    %2699 = vmatprep.subr.bf16.mxu0 %v2459
    %2700 = vmatpush1.bf16.msra.mxu0 %v2458
    %2701 = vmatprep.subr.bf16.mxu0 %v2455
    %2702 = vmatpush1.bf16.msra.mxu0 %v2454
    %2703 = vmatprep.subr.bf16.mxu0 %v2515
    %2704 = vmatpush2.bf16.msra.mxu0 %v2514
    %2705 = vmatprep.subr.bf16.mxu0 %v2511
    %2706 = vmatpush2.bf16.msra.mxu0 %v2510
    %2707 = vmatprep.subr.bf16.mxu0 %v2507
    %2708 = vmatpush2.bf16.msra.mxu0 %v2506
    %2709 = vmatprep.subr.bf16.mxu0 %v2503
    %2710 = vmatpush2.bf16.msra.mxu0 %v2502
    %2711 = vmatprep.subr.bf16.mxu0 %v2499
    %2712 = vmatpush2.bf16.msra.mxu0 %v2498
    %2713 = vmatprep.subr.bf16.mxu0 %v2495
    %2714 = vmatpush2.bf16.msra.mxu0 %v2494
    %2715 = vmatprep.subr.bf16.mxu0 %v2491
    %2716 = vmatpush2.bf16.msra.mxu0 %v2490
    %2717 = vmatprep.subr.bf16.mxu0 %v2487
    %2718 = vmatpush2.bf16.msra.mxu0 %v2486
    %2719 = vmatprep.mubr.bf16.mxu0 %v1836
    %2720 = vmatmul.mubr.bf16.gmra.mxu0 %v1835
    %v2721 = vpop.f32.mrf.mxu0
    %v2722 = vadd.f32 %v2681, %v2721
    %v2723 = vpop.f32.mrf.mxu0
    %v2724 = vadd.f32 %v2683, %v2723
    %v2725 = vpop.f32.mrf.mxu0
    %v2726 = vpop.f32.mrf.mxu0
    %2727 = vdwg.mxu0
    %2728 = vmatprep.subr.bf16.mxu0 %v2421
    %2729 = vmatpush1.bf16.msra.mxu0 %v2420
    %2730 = vmatprep.subr.bf16.mxu0 %v2417
    %2731 = vmatpush1.bf16.msra.mxu0 %v2416
    %2732 = vmatprep.subr.bf16.mxu0 %v2413
    %2733 = vmatpush1.bf16.msra.mxu0 %v2412
    %2734 = vmatprep.subr.bf16.mxu0 %v2409
    %2735 = vmatpush1.bf16.msra.mxu0 %v2408
    %2736 = vmatprep.subr.bf16.mxu0 %v2405
    %2737 = vmatpush1.bf16.msra.mxu0 %v2404
    %2738 = vmatprep.subr.bf16.mxu0 %v2401
    %2739 = vmatpush1.bf16.msra.mxu0 %v2400
    %2740 = vmatprep.subr.bf16.mxu0 %v2397
    %2741 = vmatpush1.bf16.msra.mxu0 %v2396
    %2742 = vmatprep.subr.bf16.mxu0 %v2393
    %2743 = vmatpush1.bf16.msra.mxu0 %v2392
    %2744 = vmatprep.subr.bf16.mxu0 %v2453
    %2745 = vmatpush2.bf16.msra.mxu0 %v2452
    %2746 = vmatprep.subr.bf16.mxu0 %v2449
    %2747 = vmatpush2.bf16.msra.mxu0 %v2448
    %2748 = vmatprep.subr.bf16.mxu0 %v2445
    %2749 = vmatpush2.bf16.msra.mxu0 %v2444
    %2750 = vmatprep.subr.bf16.mxu0 %v2441
    %2751 = vmatpush2.bf16.msra.mxu0 %v2440
    %2752 = vmatprep.subr.bf16.mxu0 %v2437
    %2753 = vmatpush2.bf16.msra.mxu0 %v2436
    %2754 = vmatprep.subr.bf16.mxu0 %v2433
    %2755 = vmatpush2.bf16.msra.mxu0 %v2432
    %2756 = vmatprep.subr.bf16.mxu0 %v2429
    %2757 = vmatpush2.bf16.msra.mxu0 %v2428
    %2758 = vmatprep.subr.bf16.mxu0 %v2425
    %2759 = vmatpush2.bf16.msra.mxu0 %v2424
    %2760 = vmatprep.mubr.bf16.mxu0 %v1834
    %2761 = vmatmul.mubr.bf16.gmra.mxu0 %v1833
    %v2762 = vpop.f32.mrf.mxu0
    %v2763 = vadd.f32 %v2001, %v2762
    %v2764 = vpop.f32.mrf.mxu0
    %v2765 = vadd.f32 %v2005, %v2764
    %v2766 = vpop.f32.mrf.mxu0
    %v2767 = vpop.f32.mrf.mxu0
    %2768 = vdwg.mxu0
    %2769 = vmatprep.subr.bf16.mxu0 %v2485
    %2770 = vmatpush1.bf16.msra.mxu0 %v2484
    %2771 = vmatprep.subr.bf16.mxu0 %v2481
    %2772 = vmatpush1.bf16.msra.mxu0 %v2480
    %2773 = vmatprep.subr.bf16.mxu0 %v2477
    %2774 = vmatpush1.bf16.msra.mxu0 %v2476
    %2775 = vmatprep.subr.bf16.mxu0 %v2473
    %2776 = vmatpush1.bf16.msra.mxu0 %v2472
    %2777 = vmatprep.subr.bf16.mxu0 %v2469
    %2778 = vmatpush1.bf16.msra.mxu0 %v2468
    %2779 = vmatprep.subr.bf16.mxu0 %v2465
    %2780 = vmatpush1.bf16.msra.mxu0 %v2464
    %2781 = vmatprep.subr.bf16.mxu0 %v2461
    %2782 = vmatpush1.bf16.msra.mxu0 %v2460
    %2783 = vmatprep.subr.bf16.mxu0 %v2457
    %2784 = vmatpush1.bf16.msra.mxu0 %v2456
    %2785 = vmatprep.subr.bf16.mxu0 %v2517
    %2786 = vmatpush2.bf16.msra.mxu0 %v2516
    %2787 = vmatprep.subr.bf16.mxu0 %v2513
    %2788 = vmatpush2.bf16.msra.mxu0 %v2512
    %2789 = vmatprep.subr.bf16.mxu0 %v2509
    %2790 = vmatpush2.bf16.msra.mxu0 %v2508
    %2791 = vmatprep.subr.bf16.mxu0 %v2505
    %2792 = vmatpush2.bf16.msra.mxu0 %v2504
    %2793 = vmatprep.subr.bf16.mxu0 %v2501
    %2794 = vmatpush2.bf16.msra.mxu0 %v2500
    %2795 = vmatprep.subr.bf16.mxu0 %v2497
    %2796 = vmatpush2.bf16.msra.mxu0 %v2496
    %2797 = vmatprep.subr.bf16.mxu0 %v2493
    %2798 = vmatpush2.bf16.msra.mxu0 %v2492
    %2799 = vmatprep.subr.bf16.mxu0 %v2489
    %2800 = vmatpush2.bf16.msra.mxu0 %v2488
    %2801 = vmatprep.mubr.bf16.mxu0 %v1836
    %2802 = vmatmul.mubr.bf16.gmra.mxu0 %v1835
    %v2803 = vpop.f32.mrf.mxu0
    %v2804 = vadd.f32 %v2763, %v2803
    %v2805 = vpop.f32.mrf.mxu0
    %v2806 = vadd.f32 %v2765, %v2805
    %v2807 = vpop.f32.mrf.mxu0
    %v2808 = vpop.f32.mrf.mxu0
    %2809 = vdwg.mxu0
    %v2810 = vmul.f32 %v2722, 0.2
    %v2811 = vmul.f32 %v2724, 0.2
    %v2812 = vmul.f32 %v2804, 0.2
    %v2813 = vmul.f32 %v2806, 0.2
    %v2814 = vmax.f32 %v2722, %v2810
    %v2815 = vmax.f32 %v2724, %v2811
    %v2816 = vmax.f32 %v2804, %v2812
    %v2817 = vmax.f32 %v2806, %v2813
    %v2818 = vld [vmem:[%s5] sm:$0xf]
    %v2819 = vunpack.c.l.bf16 %v2818
    %v2821 = vlaneseq
    %v2822 = vshrl.u32 %v2821, 7
    %v2823 = vsub.s32 0, %v2822
    %v2824 = vrot.slane %v2819, %v2823
    %v2825 = vlaneseq
    %v2826 = vshrl.u32 %v2825, 7
    %v2827 = vsub.s32 2, %v2826
    %v2828 = vrot.slane %v2819, %v2827
    %v2829 = vlaneseq
    %v2830 = vshrl.u32 %v2829, 7
    %v2831 = vsub.s32 4, %v2830
    %v2832 = vrot.slane %v2819, %v2831
    %v2833 = vlaneseq
    %v2834 = vshrl.u32 %v2833, 7
    %v2835 = vsub.s32 6, %v2834
    %v2836 = vrot.slane %v2819, %v2835
    %v2841 = vlaneseq
    %v2842 = vshrl.u32 %v2841, 7
    %v2843 = vsub.s32 0, %v2842
    %v2844 = vrot.slane %v2824, %v2843
    %v2845 = vlaneseq
    %v2846 = vshrl.u32 %v2845, 7
    %v2847 = vsub.s32 0, %v2846
    %v2848 = vrot.slane %v2828, %v2847
    %v2849 = vlaneseq
    %v2850 = vshrl.u32 %v2849, 7
    %v2851 = vsub.s32 0, %v2850
    %v2852 = vrot.slane %v2832, %v2851
    %v2853 = vlaneseq
    %v2854 = vshrl.u32 %v2853, 7
    %v2855 = vsub.s32 0, %v2854
    %v2856 = vrot.slane %v2836, %v2855
    %v2857 = vmul.f32 %v2814, %v2844
    %v2858 = vmul.f32 %v2815, %v2848
    %v2859 = vmul.f32 %v2816, %v2852
    %v2860 = vmul.f32 %v2817, %v2856
    %v2861 = vadd.f32 %v2857, %v2858
    %v2862 = vadd.f32 %v2861, %v2859
    %v2863 = vadd.f32 %v2862, %v2860
    %2864 = vadd.xlane.f32.xlu0 %v2863
    %v2865 = vpop.xlane.xlu0 %2864
    %v2866 = vld [vmem:[#allocation2] sm:$0x1]
    %v2867 = vunpack.c.l.bf16 %v2866
    %v2868 = vlaneseq
    %v2869 = vshrl.u32 %v2868, 7
    %v2870 = vsub.s32 0, %v2869
    %v2871 = vrot.slane %v2867, %v2870
    %v2872 = vadd.f32 %v2865, %v2871
    %vm2873 = vcmask 7168
    %2874 = vst.msk [vmem:[%s7] sm:$0xff] %vm2873, %v2872
    // Predicated region
    $region38: #{discriminator_apply.1} parent=1 // pred_check
      _
    $region39: #{discriminator_apply.1} parent=1 // pred_check_branch
      %2876 = sbr.rel (0) target = $region41
    $region40: #{discriminator_apply.1} parent=1 // pred_region
      _
    $region41: #{discriminator_apply.1} parent=1 // pred_fallthru
      _
    // Predicated region
    $region42: #{discriminator_apply.1} parent=1 // pred_check
      _
    $region43: #{discriminator_apply.1} parent=1 // pred_check_branch
      %2878 = sbr.rel (0) target = $region45
    $region44: #{discriminator_apply.1} parent=1 // pred_region
      _
    $region45: #{discriminator_apply.1} parent=1 // pred_fallthru
      _
    %2879 = vsyncpa [#allocation4], 1
    %2880 = vsyncpa [#allocation6], 1

</llo_original>
